<compile_context>
chip_gen: v7x
topology: tpu7x:2x2x1
jax: 0.10.0
libtpu: 0.0.40
codegen_flags: <defaults>
</compile_context>

<pallas_src>
import functools

import jax
import jax.numpy as jnp
from jax.experimental import pallas as pl
from jax.experimental.pallas import tpu as pltpu


# ------------------------------ slab layout ----------------------------------
def _pad8(n):
    return (n + 7) // 8 * 8


def _slab_layout(input_size, hidden_size, num_layers, output_size):
    """Static row offsets of every parameter block inside the packed slab."""
    H = hidden_size
    offsets = []
    row = 0
    for layer in range(num_layers):
        in_sz = input_size if layer == 0 else H
        ih_rows = _pad8(in_sz)
        ih_off = row
        hh_off = ih_off + ih_rows
        b_off = hh_off + H
        row = b_off + 8                       # bias block padded to 8 rows
        offsets.append((ih_off, ih_rows, hh_off, b_off))
    fc_off = row
    row += _pad8(output_size + 1)             # O weight rows + 1 bias row
    return tuple(offsets), fc_off, row


# ------------------------------ fused kernel ---------------------------------
def make_fused_kernel(T, B, num_layers, H, O, offsets, fc_off):
    """Builds the fused (num_layers x LSTM) + Linear forward kernel."""

    def kernel(x_ref, w_ref, out_ref):
        seq = x_ref[...]                                  # (T*B, in0_pad), time-major rows
        h = None
        for layer in range(num_layers):
            ih_off, ih_rows, hh_off, b_off = offsets[layer]
            last_layer = layer == num_layers - 1

            # Static, sublane-aligned slices out of the single packed slab.
            w_ih = w_ref[ih_off:ih_off + ih_rows, :]      # (in_pad, 4H)
            w_hh = w_ref[hh_off:hh_off + H, :]            # (H, 4H)
            bias = w_ref[b_off:b_off + 1, :]              # (1, 4H)  (b_ih + b_hh)

            # Hoisted input projection + bias: one batched matmul per layer,
            # off the serial critical path of the recurrence.
            gx = jnp.dot(seq, w_ih, preferred_element_type=jnp.float32) + bias  # (T*B, 4H)

            h = jnp.zeros((B, H), jnp.float32)
            c = jnp.zeros((B, H), jnp.float32)
            hs = []

            # T is small & static -> fully unrolled loop with static slices.
            for t in range(T):
                gates = gx[t * B:(t + 1) * B, :] + jnp.dot(
                    h, w_hh, preferred_element_type=jnp.float32)  # (B, 4H) one vreg wide
                # Single whole-vreg transcendental (EUP). The g-gate columns of
                # the weights/bias were pre-scaled by 2 at packing time, so
                # tanh(g) == 2*sigmoid(2g) - 1 needs only a VPU fma here.
                sig = jax.nn.sigmoid(gates)
                i_g = sig[:, 0 * H:1 * H]
                f_g = sig[:, 1 * H:2 * H]
                g_g = 2.0 * sig[:, 2 * H:3 * H] - 1.0
                o_g = sig[:, 3 * H:4 * H]
                c = f_g * c + i_g * g_g
                h = o_g * jnp.tanh(c)
                if not last_layer:
                    hs.append(h)                          # stays in vregs

            if not last_layer:
                seq = jnp.concatenate(hs, axis=0)         # (T*B, H), register-level

        # h == lstm_out[:, -1, :]; Dropout(p=0.2) is identity in eval mode.
        # FC head on the VPU/XLU (O == 1): lane multiply + lane reduce; avoids
        # a lone (B,H)@(H,1) MXU push/pop at the epilogue.
        fc_w_rows = w_ref[fc_off:fc_off + O, 0:H]         # (O, H)
        fc_b_row = w_ref[fc_off + O:fc_off + O + 1, 0:O]  # (1, O)
        if O == 1:
            out = jnp.sum(h * fc_w_rows, axis=1, keepdims=True)
        else:
            out = jax.lax.dot_general(h, fc_w_rows, (((1,), (1,)), ((), ())),
                                      preferred_element_type=jnp.float32)
        out_ref[...] = out + fc_b_row

    return kernel


# --------------------------------- forward -----------------------------------
@functools.partial(
    jax.jit,
    static_argnames=("input_size", "hidden_size", "num_layers", "output_size"))
def stock_price_regressor_forward(x, packed_w, *, input_size, hidden_size,
                                  num_layers, output_size):
    """x: (B, T, input_size) batch_first, as in the PyTorch module."""
    B, T, I = x.shape
    H, O = hidden_size, output_size
    offsets, fc_off, total_rows = _slab_layout(I, H, num_layers, O)
    in0_pad = _pad8(I)

    # Time-major rows: row t*B + b == x[b, t, :]; zero-pad the feature dim so
    # the layer-0 contraction matches the padded w_ih rows (padded rows are 0).
    x2d = jnp.transpose(x, (1, 0, 2)).reshape(T * B, I).astype(jnp.float32)
    x2d = jnp.pad(x2d, ((0, 0), (0, in0_pad - I)))

    vmem = pl.BlockSpec(memory_space=pltpu.MemorySpace.VMEM)  # whole array, VMEM resident
    return pl.pallas_call(
        make_fused_kernel(T, B, num_layers, H, O, offsets, fc_off),
        out_shape=jax.ShapeDtypeStruct((B, O), jnp.float32),
        in_specs=[vmem, vmem],
        out_specs=vmem,
    )(x2d, packed_w)


# --------------------------- parameter construction --------------------------
def init_params(key, input_size, hidden_size, num_layers, output_size):
    """PyTorch-layout params with U(-1/sqrt(H), 1/sqrt(H)) init."""
    bound = 1.0 / float(hidden_size) ** 0.5
    lstm_raw = []
    for layer in range(num_layers):
        in_sz = input_size if layer == 0 else hidden_size
        key, k1, k2, k3, k4 = jax.random.split(key, 5)
        w_ih = jax.random.uniform(k1, (4 * hidden_size, in_sz),
                                  minval=-bound, maxval=bound, dtype=jnp.float32)
        w_hh = jax.random.uniform(k2, (4 * hidden_size, hidden_size),
                                  minval=-bound, maxval=bound, dtype=jnp.float32)
        b_ih = jax.random.uniform(k3, (4 * hidden_size,),
                                  minval=-bound, maxval=bound, dtype=jnp.float32)
        b_hh = jax.random.uniform(k4, (4 * hidden_size,),
                                  minval=-bound, maxval=bound, dtype=jnp.float32)
        lstm_raw.append((w_ih, w_hh, b_ih, b_hh))
    key, kf1, kf2 = jax.random.split(key, 3)
    fc_w = jax.random.uniform(kf1, (output_size, hidden_size),
                              minval=-bound, maxval=bound, dtype=jnp.float32)
    fc_b = jax.random.uniform(kf2, (output_size,),
                              minval=-bound, maxval=bound, dtype=jnp.float32)
    return lstm_raw, fc_w, fc_b


def pack_params(lstm_raw, fc_w, fc_b, input_size, hidden_size, num_layers,
                output_size):
    """Pack all parameters into ONE (rows, 4H) f32 slab (single DMA).

    Per layer: [w_ih^T (row-padded to 8k); w_hh^T; fused bias (8 rows)], with
    the g-gate (3rd H-chunk) columns pre-scaled by 2 so the kernel can use the
    tanh(x) = 2*sigmoid(2x) - 1 identity.  FC weight/bias live in the final
    8-row block.
    """
    H, O = hidden_size, output_size
    assert H % 8 == 0, "hidden_size must be a multiple of 8"
    offsets, fc_off, total_rows = _slab_layout(input_size, H, num_layers, O)

    gscale = jnp.concatenate([jnp.ones((1, 2 * H), jnp.float32),
                              jnp.full((1, H), 2.0, jnp.float32),
                              jnp.ones((1, H), jnp.float32)], axis=1)

    blocks = []
    for layer, (w_ih, w_hh, b_ih, b_hh) in enumerate(lstm_raw):
        in_sz = input_size if layer == 0 else H
        ih_rows = _pad8(in_sz)
        w_ih_t = (w_ih.T.astype(jnp.float32)) * gscale            # (in, 4H)
        w_hh_t = (w_hh.T.astype(jnp.float32)) * gscale            # (H, 4H)
        bias = ((b_ih + b_hh).reshape(1, 4 * H).astype(jnp.float32)) * gscale
        blocks.append(jnp.pad(w_ih_t, ((0, ih_rows - in_sz), (0, 0))))
        blocks.append(w_hh_t)
        blocks.append(jnp.pad(bias, ((0, 7), (0, 0))))

    fc_rows = _pad8(O + 1)
    fc_block = jnp.zeros((fc_rows, 4 * H), jnp.float32)
    fc_block = fc_block.at[:O, :H].set(fc_w.astype(jnp.float32))  # (O, H)
    fc_block = fc_block.at[O, :O].set(fc_b.astype(jnp.float32))
    blocks.append(fc_block)

    slab = jnp.concatenate(blocks, axis=0)
    assert slab.shape == (total_rows, 4 * H), slab.shape
    return slab


# ------------------------------ pure-JAX reference ---------------------------
def reference_forward(x, lstm_raw, fc_w, fc_b):
    B, T, _ = x.shape
    h_seq = jnp.transpose(x, (1, 0, 2)).astype(jnp.float32)        # (T, B, in)
    for (w_ih, w_hh, b_ih, b_hh) in lstm_raw:
        H = w_hh.shape[1]
        h = jnp.zeros((B, H), jnp.float32)
        c = jnp.zeros((B, H), jnp.float32)
        outs = []
        for t in range(T):
            gates = h_seq[t] @ w_ih.T + h @ w_hh.T + b_ih + b_hh
            i_g = jax.nn.sigmoid(gates[:, 0 * H:1 * H])
            f_g = jax.nn.sigmoid(gates[:, 1 * H:2 * H])
            g_g = jnp.tanh(gates[:, 2 * H:3 * H])
            o_g = jax.nn.sigmoid(gates[:, 3 * H:4 * H])
            c = f_g * c + i_g * g_g
            h = o_g * jnp.tanh(c)
            outs.append(h)
        h_seq = jnp.stack(outs, axis=0)
    return h_seq[-1] @ fc_w.T + fc_b


# ----------------------------------- main -------------------------------------
if __name__ == "__main__":
    batch, seq_len, input_size = 2, 8, 4
    hidden_size, num_layers, output_size = 32, 2, 1

    key = jax.random.PRNGKey(0)
    key, kx, kp = jax.random.split(key, 3)
    x = jax.random.normal(kx, (batch, seq_len, input_size), dtype=jnp.float32)

    lstm_raw, fc_w, fc_b = init_params(
        kp, input_size, hidden_size, num_layers, output_size)
    packed_w = pack_params(
        lstm_raw, fc_w, fc_b, input_size, hidden_size, num_layers, output_size)

    out = stock_price_regressor_forward(
        x, packed_w, input_size=input_size, hidden_size=hidden_size,
        num_layers=num_layers, output_size=output_size)
    jax.block_until_ready(out)
    assert out.shape == (batch, output_size), out.shape

    ref = reference_forward(x, lstm_raw, fc_w, fc_b)
    assert jnp.allclose(out, ref, atol=1e-3, rtol=1e-3), (out, ref)

    print("KERNEL_OK")
</pallas_src>

<mosaic_0001>
module attributes {stable_mosaic.version = 11 : i64} {
  func.func @kernel(%arg0: memref<16x8xf32, #tpu.memory_space<vmem>>, %arg1: memref<128x128xf32, #tpu.memory_space<vmem>>, %arg2: memref<2x1xf32, #tpu.memory_space<vmem>>) attributes {dimension_semantics = [], scalar_prefetch = 0 : i64, scratch_operands = 0 : i64, tpu.core_type = #tpu.core_type<tc>} {
    %c0 = arith.constant 0 : index
    %c0_0 = arith.constant 0 : index
    %0 = vector.load %arg0[%c0, %c0_0] : memref<16x8xf32, #tpu.memory_space<vmem>>, vector<16x8xf32>
    %c0_1 = arith.constant 0 : index
    %c0_2 = arith.constant 0 : index
    %1 = vector.load %arg1[%c0_1, %c0_2] : memref<128x128xf32, #tpu.memory_space<vmem>>, vector<8x128xf32>
    %c8 = arith.constant 8 : index
    %c0_3 = arith.constant 0 : index
    %2 = vector.load %arg1[%c8, %c0_3] : memref<128x128xf32, #tpu.memory_space<vmem>>, vector<32x128xf32>
    %c40 = arith.constant 40 : index
    %c0_4 = arith.constant 0 : index
    %3 = vector.load %arg1[%c40, %c0_4] : memref<128x128xf32, #tpu.memory_space<vmem>>, vector<1x128xf32>
    %cst = arith.constant dense<0.000000e+00> : vector<16x128xf32>
    %4 = tpu.matmul %0, %1, %cst {dimension_numbers = #tpu.dot_dimension_numbers<[1], [0], [0], [1], [0, 0, 1, 1], [], []>} : vector<16x8xf32>, vector<8x128xf32>, vector<16x128xf32> -> vector<16x128xf32>
    %5 = vector.broadcast %3 : vector<1x128xf32> to vector<16x128xf32>
    %6 = arith.addf %4, %5 : vector<16x128xf32>
    %cst_5 = arith.constant 0.000000e+00 : f32
    %7 = vector.broadcast %cst_5 : f32 to vector<2x32xf32>
    %cst_6 = arith.constant 0.000000e+00 : f32
    %8 = vector.broadcast %cst_6 : f32 to vector<2x32xf32>
    %9 = vector.extract_strided_slice %6 {offsets = [0, 0], sizes = [2, 128], strides = [1, 1]} : vector<16x128xf32> to vector<2x128xf32>
    %cst_7 = arith.constant dense<0.000000e+00> : vector<2x128xf32>
    %10 = tpu.matmul %7, %2, %cst_7 {dimension_numbers = #tpu.dot_dimension_numbers<[1], [0], [0], [1], [0, 0, 1, 1], [], []>} : vector<2x32xf32>, vector<32x128xf32>, vector<2x128xf32> -> vector<2x128xf32>
    %11 = arith.addf %9, %10 : vector<2x128xf32>
    %12 = arith.negf %11 : vector<2x128xf32>
    %13 = math.exp %12 : vector<2x128xf32>
    %cst_8 = arith.constant 1.000000e+00 : f32
    %14 = vector.broadcast %cst_8 : f32 to vector<2x128xf32>
    %15 = arith.addf %14, %13 : vector<2x128xf32>
    %16 = arith.divf %14, %15 : vector<2x128xf32>
    %17 = vector.extract_strided_slice %16 {offsets = [0, 0], sizes = [2, 32], strides = [1, 1]} : vector<2x128xf32> to vector<2x32xf32>
    %18 = vector.extract_strided_slice %16 {offsets = [0, 32], sizes = [2, 32], strides = [1, 1]} : vector<2x128xf32> to vector<2x32xf32>
    %19 = vector.extract_strided_slice %16 {offsets = [0, 64], sizes = [2, 32], strides = [1, 1]} : vector<2x128xf32> to vector<2x32xf32>
    %cst_9 = arith.constant 2.000000e+00 : f32
    %20 = vector.broadcast %cst_9 : f32 to vector<2x32xf32>
    %21 = arith.mulf %20, %19 : vector<2x32xf32>
    %cst_10 = arith.constant 1.000000e+00 : f32
    %22 = vector.broadcast %cst_10 : f32 to vector<2x32xf32>
    %23 = arith.subf %21, %22 : vector<2x32xf32>
    %24 = vector.extract_strided_slice %16 {offsets = [0, 96], sizes = [2, 32], strides = [1, 1]} : vector<2x128xf32> to vector<2x32xf32>
    %25 = arith.mulf %18, %8 : vector<2x32xf32>
    %26 = arith.mulf %17, %23 : vector<2x32xf32>
    %27 = arith.addf %25, %26 : vector<2x32xf32>
    %28 = math.tanh %27 : vector<2x32xf32>
    %29 = arith.mulf %24, %28 : vector<2x32xf32>
    %30 = vector.extract_strided_slice %6 {offsets = [2, 0], sizes = [2, 128], strides = [1, 1]} : vector<16x128xf32> to vector<2x128xf32>
    %cst_11 = arith.constant dense<0.000000e+00> : vector<2x128xf32>
    %31 = tpu.matmul %29, %2, %cst_11 {dimension_numbers = #tpu.dot_dimension_numbers<[1], [0], [0], [1], [0, 0, 1, 1], [], []>} : vector<2x32xf32>, vector<32x128xf32>, vector<2x128xf32> -> vector<2x128xf32>
    %32 = arith.addf %30, %31 : vector<2x128xf32>
    %33 = arith.negf %32 : vector<2x128xf32>
    %34 = math.exp %33 : vector<2x128xf32>
    %cst_12 = arith.constant 1.000000e+00 : f32
    %35 = vector.broadcast %cst_12 : f32 to vector<2x128xf32>
    %36 = arith.addf %35, %34 : vector<2x128xf32>
    %37 = arith.divf %35, %36 : vector<2x128xf32>
    %38 = vector.extract_strided_slice %37 {offsets = [0, 0], sizes = [2, 32], strides = [1, 1]} : vector<2x128xf32> to vector<2x32xf32>
    %39 = vector.extract_strided_slice %37 {offsets = [0, 32], sizes = [2, 32], strides = [1, 1]} : vector<2x128xf32> to vector<2x32xf32>
    %40 = vector.extract_strided_slice %37 {offsets = [0, 64], sizes = [2, 32], strides = [1, 1]} : vector<2x128xf32> to vector<2x32xf32>
    %cst_13 = arith.constant 2.000000e+00 : f32
    %41 = vector.broadcast %cst_13 : f32 to vector<2x32xf32>
    %42 = arith.mulf %41, %40 : vector<2x32xf32>
    %cst_14 = arith.constant 1.000000e+00 : f32
    %43 = vector.broadcast %cst_14 : f32 to vector<2x32xf32>
    %44 = arith.subf %42, %43 : vector<2x32xf32>
    %45 = vector.extract_strided_slice %37 {offsets = [0, 96], sizes = [2, 32], strides = [1, 1]} : vector<2x128xf32> to vector<2x32xf32>
    %46 = arith.mulf %39, %27 : vector<2x32xf32>
    %47 = arith.mulf %38, %44 : vector<2x32xf32>
    %48 = arith.addf %46, %47 : vector<2x32xf32>
    %49 = math.tanh %48 : vector<2x32xf32>
    %50 = arith.mulf %45, %49 : vector<2x32xf32>
    %51 = vector.extract_strided_slice %6 {offsets = [4, 0], sizes = [2, 128], strides = [1, 1]} : vector<16x128xf32> to vector<2x128xf32>
    %cst_15 = arith.constant dense<0.000000e+00> : vector<2x128xf32>
    %52 = tpu.matmul %50, %2, %cst_15 {dimension_numbers = #tpu.dot_dimension_numbers<[1], [0], [0], [1], [0, 0, 1, 1], [], []>} : vector<2x32xf32>, vector<32x128xf32>, vector<2x128xf32> -> vector<2x128xf32>
    %53 = arith.addf %51, %52 : vector<2x128xf32>
    %54 = arith.negf %53 : vector<2x128xf32>
    %55 = math.exp %54 : vector<2x128xf32>
    %cst_16 = arith.constant 1.000000e+00 : f32
    %56 = vector.broadcast %cst_16 : f32 to vector<2x128xf32>
    %57 = arith.addf %56, %55 : vector<2x128xf32>
    %58 = arith.divf %56, %57 : vector<2x128xf32>
    %59 = vector.extract_strided_slice %58 {offsets = [0, 0], sizes = [2, 32], strides = [1, 1]} : vector<2x128xf32> to vector<2x32xf32>
    %60 = vector.extract_strided_slice %58 {offsets = [0, 32], sizes = [2, 32], strides = [1, 1]} : vector<2x128xf32> to vector<2x32xf32>
    %61 = vector.extract_strided_slice %58 {offsets = [0, 64], sizes = [2, 32], strides = [1, 1]} : vector<2x128xf32> to vector<2x32xf32>
    %cst_17 = arith.constant 2.000000e+00 : f32
    %62 = vector.broadcast %cst_17 : f32 to vector<2x32xf32>
    %63 = arith.mulf %62, %61 : vector<2x32xf32>
    %cst_18 = arith.constant 1.000000e+00 : f32
    %64 = vector.broadcast %cst_18 : f32 to vector<2x32xf32>
    %65 = arith.subf %63, %64 : vector<2x32xf32>
    %66 = vector.extract_strided_slice %58 {offsets = [0, 96], sizes = [2, 32], strides = [1, 1]} : vector<2x128xf32> to vector<2x32xf32>
    %67 = arith.mulf %60, %48 : vector<2x32xf32>
    %68 = arith.mulf %59, %65 : vector<2x32xf32>
    %69 = arith.addf %67, %68 : vector<2x32xf32>
    %70 = math.tanh %69 : vector<2x32xf32>
    %71 = arith.mulf %66, %70 : vector<2x32xf32>
    %72 = vector.extract_strided_slice %6 {offsets = [6, 0], sizes = [2, 128], strides = [1, 1]} : vector<16x128xf32> to vector<2x128xf32>
    %cst_19 = arith.constant dense<0.000000e+00> : vector<2x128xf32>
    %73 = tpu.matmul %71, %2, %cst_19 {dimension_numbers = #tpu.dot_dimension_numbers<[1], [0], [0], [1], [0, 0, 1, 1], [], []>} : vector<2x32xf32>, vector<32x128xf32>, vector<2x128xf32> -> vector<2x128xf32>
    %74 = arith.addf %72, %73 : vector<2x128xf32>
    %75 = arith.negf %74 : vector<2x128xf32>
    %76 = math.exp %75 : vector<2x128xf32>
    %cst_20 = arith.constant 1.000000e+00 : f32
    %77 = vector.broadcast %cst_20 : f32 to vector<2x128xf32>
    %78 = arith.addf %77, %76 : vector<2x128xf32>
    %79 = arith.divf %77, %78 : vector<2x128xf32>
    %80 = vector.extract_strided_slice %79 {offsets = [0, 0], sizes = [2, 32], strides = [1, 1]} : vector<2x128xf32> to vector<2x32xf32>
    %81 = vector.extract_strided_slice %79 {offsets = [0, 32], sizes = [2, 32], strides = [1, 1]} : vector<2x128xf32> to vector<2x32xf32>
    %82 = vector.extract_strided_slice %79 {offsets = [0, 64], sizes = [2, 32], strides = [1, 1]} : vector<2x128xf32> to vector<2x32xf32>
    %cst_21 = arith.constant 2.000000e+00 : f32
    %83 = vector.broadcast %cst_21 : f32 to vector<2x32xf32>
    %84 = arith.mulf %83, %82 : vector<2x32xf32>
    %cst_22 = arith.constant 1.000000e+00 : f32
    %85 = vector.broadcast %cst_22 : f32 to vector<2x32xf32>
    %86 = arith.subf %84, %85 : vector<2x32xf32>
    %87 = vector.extract_strided_slice %79 {offsets = [0, 96], sizes = [2, 32], strides = [1, 1]} : vector<2x128xf32> to vector<2x32xf32>
    %88 = arith.mulf %81, %69 : vector<2x32xf32>
    %89 = arith.mulf %80, %86 : vector<2x32xf32>
    %90 = arith.addf %88, %89 : vector<2x32xf32>
    %91 = math.tanh %90 : vector<2x32xf32>
    %92 = arith.mulf %87, %91 : vector<2x32xf32>
    %93 = vector.extract_strided_slice %6 {offsets = [8, 0], sizes = [2, 128], strides = [1, 1]} : vector<16x128xf32> to vector<2x128xf32>
    %cst_23 = arith.constant dense<0.000000e+00> : vector<2x128xf32>
    %94 = tpu.matmul %92, %2, %cst_23 {dimension_numbers = #tpu.dot_dimension_numbers<[1], [0], [0], [1], [0, 0, 1, 1], [], []>} : vector<2x32xf32>, vector<32x128xf32>, vector<2x128xf32> -> vector<2x128xf32>
    %95 = arith.addf %93, %94 : vector<2x128xf32>
    %96 = arith.negf %95 : vector<2x128xf32>
    %97 = math.exp %96 : vector<2x128xf32>
    %cst_24 = arith.constant 1.000000e+00 : f32
    %98 = vector.broadcast %cst_24 : f32 to vector<2x128xf32>
    %99 = arith.addf %98, %97 : vector<2x128xf32>
    %100 = arith.divf %98, %99 : vector<2x128xf32>
    %101 = vector.extract_strided_slice %100 {offsets = [0, 0], sizes = [2, 32], strides = [1, 1]} : vector<2x128xf32> to vector<2x32xf32>
    %102 = vector.extract_strided_slice %100 {offsets = [0, 32], sizes = [2, 32], strides = [1, 1]} : vector<2x128xf32> to vector<2x32xf32>
    %103 = vector.extract_strided_slice %100 {offsets = [0, 64], sizes = [2, 32], strides = [1, 1]} : vector<2x128xf32> to vector<2x32xf32>
    %cst_25 = arith.constant 2.000000e+00 : f32
    %104 = vector.broadcast %cst_25 : f32 to vector<2x32xf32>
    %105 = arith.mulf %104, %103 : vector<2x32xf32>
    %cst_26 = arith.constant 1.000000e+00 : f32
    %106 = vector.broadcast %cst_26 : f32 to vector<2x32xf32>
    %107 = arith.subf %105, %106 : vector<2x32xf32>
    %108 = vector.extract_strided_slice %100 {offsets = [0, 96], sizes = [2, 32], strides = [1, 1]} : vector<2x128xf32> to vector<2x32xf32>
    %109 = arith.mulf %102, %90 : vector<2x32xf32>
    %110 = arith.mulf %101, %107 : vector<2x32xf32>
    %111 = arith.addf %109, %110 : vector<2x32xf32>
    %112 = math.tanh %111 : vector<2x32xf32>
    %113 = arith.mulf %108, %112 : vector<2x32xf32>
    %114 = vector.extract_strided_slice %6 {offsets = [10, 0], sizes = [2, 128], strides = [1, 1]} : vector<16x128xf32> to vector<2x128xf32>
    %cst_27 = arith.constant dense<0.000000e+00> : vector<2x128xf32>
    %115 = tpu.matmul %113, %2, %cst_27 {dimension_numbers = #tpu.dot_dimension_numbers<[1], [0], [0], [1], [0, 0, 1, 1], [], []>} : vector<2x32xf32>, vector<32x128xf32>, vector<2x128xf32> -> vector<2x128xf32>
    %116 = arith.addf %114, %115 : vector<2x128xf32>
    %117 = arith.negf %116 : vector<2x128xf32>
    %118 = math.exp %117 : vector<2x128xf32>
    %cst_28 = arith.constant 1.000000e+00 : f32
    %119 = vector.broadcast %cst_28 : f32 to vector<2x128xf32>
    %120 = arith.addf %119, %118 : vector<2x128xf32>
    %121 = arith.divf %119, %120 : vector<2x128xf32>
    %122 = vector.extract_strided_slice %121 {offsets = [0, 0], sizes = [2, 32], strides = [1, 1]} : vector<2x128xf32> to vector<2x32xf32>
    %123 = vector.extract_strided_slice %121 {offsets = [0, 32], sizes = [2, 32], strides = [1, 1]} : vector<2x128xf32> to vector<2x32xf32>
    %124 = vector.extract_strided_slice %121 {offsets = [0, 64], sizes = [2, 32], strides = [1, 1]} : vector<2x128xf32> to vector<2x32xf32>
    %cst_29 = arith.constant 2.000000e+00 : f32
    %125 = vector.broadcast %cst_29 : f32 to vector<2x32xf32>
    %126 = arith.mulf %125, %124 : vector<2x32xf32>
    %cst_30 = arith.constant 1.000000e+00 : f32
    %127 = vector.broadcast %cst_30 : f32 to vector<2x32xf32>
    %128 = arith.subf %126, %127 : vector<2x32xf32>
    %129 = vector.extract_strided_slice %121 {offsets = [0, 96], sizes = [2, 32], strides = [1, 1]} : vector<2x128xf32> to vector<2x32xf32>
    %130 = arith.mulf %123, %111 : vector<2x32xf32>
    %131 = arith.mulf %122, %128 : vector<2x32xf32>
    %132 = arith.addf %130, %131 : vector<2x32xf32>
    %133 = math.tanh %132 : vector<2x32xf32>
    %134 = arith.mulf %129, %133 : vector<2x32xf32>
    %135 = vector.extract_strided_slice %6 {offsets = [12, 0], sizes = [2, 128], strides = [1, 1]} : vector<16x128xf32> to vector<2x128xf32>
    %cst_31 = arith.constant dense<0.000000e+00> : vector<2x128xf32>
    %136 = tpu.matmul %134, %2, %cst_31 {dimension_numbers = #tpu.dot_dimension_numbers<[1], [0], [0], [1], [0, 0, 1, 1], [], []>} : vector<2x32xf32>, vector<32x128xf32>, vector<2x128xf32> -> vector<2x128xf32>
    %137 = arith.addf %135, %136 : vector<2x128xf32>
    %138 = arith.negf %137 : vector<2x128xf32>
    %139 = math.exp %138 : vector<2x128xf32>
    %cst_32 = arith.constant 1.000000e+00 : f32
    %140 = vector.broadcast %cst_32 : f32 to vector<2x128xf32>
    %141 = arith.addf %140, %139 : vector<2x128xf32>
    %142 = arith.divf %140, %141 : vector<2x128xf32>
    %143 = vector.extract_strided_slice %142 {offsets = [0, 0], sizes = [2, 32], strides = [1, 1]} : vector<2x128xf32> to vector<2x32xf32>
    %144 = vector.extract_strided_slice %142 {offsets = [0, 32], sizes = [2, 32], strides = [1, 1]} : vector<2x128xf32> to vector<2x32xf32>
    %145 = vector.extract_strided_slice %142 {offsets = [0, 64], sizes = [2, 32], strides = [1, 1]} : vector<2x128xf32> to vector<2x32xf32>
    %cst_33 = arith.constant 2.000000e+00 : f32
    %146 = vector.broadcast %cst_33 : f32 to vector<2x32xf32>
    %147 = arith.mulf %146, %145 : vector<2x32xf32>
    %cst_34 = arith.constant 1.000000e+00 : f32
    %148 = vector.broadcast %cst_34 : f32 to vector<2x32xf32>
    %149 = arith.subf %147, %148 : vector<2x32xf32>
    %150 = vector.extract_strided_slice %142 {offsets = [0, 96], sizes = [2, 32], strides = [1, 1]} : vector<2x128xf32> to vector<2x32xf32>
    %151 = arith.mulf %144, %132 : vector<2x32xf32>
    %152 = arith.mulf %143, %149 : vector<2x32xf32>
    %153 = arith.addf %151, %152 : vector<2x32xf32>
    %154 = math.tanh %153 : vector<2x32xf32>
    %155 = arith.mulf %150, %154 : vector<2x32xf32>
    %156 = vector.extract_strided_slice %6 {offsets = [14, 0], sizes = [2, 128], strides = [1, 1]} : vector<16x128xf32> to vector<2x128xf32>
    %cst_35 = arith.constant dense<0.000000e+00> : vector<2x128xf32>
    %157 = tpu.matmul %155, %2, %cst_35 {dimension_numbers = #tpu.dot_dimension_numbers<[1], [0], [0], [1], [0, 0, 1, 1], [], []>} : vector<2x32xf32>, vector<32x128xf32>, vector<2x128xf32> -> vector<2x128xf32>
    %158 = arith.addf %156, %157 : vector<2x128xf32>
    %159 = arith.negf %158 : vector<2x128xf32>
    %160 = math.exp %159 : vector<2x128xf32>
    %cst_36 = arith.constant 1.000000e+00 : f32
    %161 = vector.broadcast %cst_36 : f32 to vector<2x128xf32>
    %162 = arith.addf %161, %160 : vector<2x128xf32>
    %163 = arith.divf %161, %162 : vector<2x128xf32>
    %164 = vector.extract_strided_slice %163 {offsets = [0, 0], sizes = [2, 32], strides = [1, 1]} : vector<2x128xf32> to vector<2x32xf32>
    %165 = vector.extract_strided_slice %163 {offsets = [0, 32], sizes = [2, 32], strides = [1, 1]} : vector<2x128xf32> to vector<2x32xf32>
    %166 = vector.extract_strided_slice %163 {offsets = [0, 64], sizes = [2, 32], strides = [1, 1]} : vector<2x128xf32> to vector<2x32xf32>
    %cst_37 = arith.constant 2.000000e+00 : f32
    %167 = vector.broadcast %cst_37 : f32 to vector<2x32xf32>
    %168 = arith.mulf %167, %166 : vector<2x32xf32>
    %cst_38 = arith.constant 1.000000e+00 : f32
    %169 = vector.broadcast %cst_38 : f32 to vector<2x32xf32>
    %170 = arith.subf %168, %169 : vector<2x32xf32>
    %171 = vector.extract_strided_slice %163 {offsets = [0, 96], sizes = [2, 32], strides = [1, 1]} : vector<2x128xf32> to vector<2x32xf32>
    %172 = arith.mulf %165, %153 : vector<2x32xf32>
    %173 = arith.mulf %164, %170 : vector<2x32xf32>
    %174 = arith.addf %172, %173 : vector<2x32xf32>
    %175 = math.tanh %174 : vector<2x32xf32>
    %176 = arith.mulf %171, %175 : vector<2x32xf32>
    %177 = tpu.concatenate %29, %50, %71, %92, %113, %134, %155, %176 in 0 : vector<2x32xf32>, vector<2x32xf32>, vector<2x32xf32>, vector<2x32xf32>, vector<2x32xf32>, vector<2x32xf32>, vector<2x32xf32>, vector<2x32xf32> -> vector<16x32xf32>
    %c48 = arith.constant 48 : index
    %c0_39 = arith.constant 0 : index
    %178 = vector.load %arg1[%c48, %c0_39] : memref<128x128xf32, #tpu.memory_space<vmem>>, vector<32x128xf32>
    %c80 = arith.constant 80 : index
    %c0_40 = arith.constant 0 : index
    %179 = vector.load %arg1[%c80, %c0_40] : memref<128x128xf32, #tpu.memory_space<vmem>>, vector<32x128xf32>
    %c112 = arith.constant 112 : index
    %c0_41 = arith.constant 0 : index
    %180 = vector.load %arg1[%c112, %c0_41] : memref<128x128xf32, #tpu.memory_space<vmem>>, vector<1x128xf32>
    %cst_42 = arith.constant dense<0.000000e+00> : vector<16x128xf32>
    %181 = tpu.matmul %177, %178, %cst_42 {dimension_numbers = #tpu.dot_dimension_numbers<[1], [0], [0], [1], [0, 0, 1, 1], [], []>} : vector<16x32xf32>, vector<32x128xf32>, vector<16x128xf32> -> vector<16x128xf32>
    %182 = vector.broadcast %180 : vector<1x128xf32> to vector<16x128xf32>
    %183 = arith.addf %181, %182 : vector<16x128xf32>
    %cst_43 = arith.constant 0.000000e+00 : f32
    %184 = vector.broadcast %cst_43 : f32 to vector<2x32xf32>
    %cst_44 = arith.constant 0.000000e+00 : f32
    %185 = vector.broadcast %cst_44 : f32 to vector<2x32xf32>
    %186 = vector.extract_strided_slice %183 {offsets = [0, 0], sizes = [2, 128], strides = [1, 1]} : vector<16x128xf32> to vector<2x128xf32>
    %cst_45 = arith.constant dense<0.000000e+00> : vector<2x128xf32>
    %187 = tpu.matmul %184, %179, %cst_45 {dimension_numbers = #tpu.dot_dimension_numbers<[1], [0], [0], [1], [0, 0, 1, 1], [], []>} : vector<2x32xf32>, vector<32x128xf32>, vector<2x128xf32> -> vector<2x128xf32>
    %188 = arith.addf %186, %187 : vector<2x128xf32>
    %189 = arith.negf %188 : vector<2x128xf32>
    %190 = math.exp %189 : vector<2x128xf32>
    %cst_46 = arith.constant 1.000000e+00 : f32
    %191 = vector.broadcast %cst_46 : f32 to vector<2x128xf32>
    %192 = arith.addf %191, %190 : vector<2x128xf32>
    %193 = arith.divf %191, %192 : vector<2x128xf32>
    %194 = vector.extract_strided_slice %193 {offsets = [0, 0], sizes = [2, 32], strides = [1, 1]} : vector<2x128xf32> to vector<2x32xf32>
    %195 = vector.extract_strided_slice %193 {offsets = [0, 32], sizes = [2, 32], strides = [1, 1]} : vector<2x128xf32> to vector<2x32xf32>
    %196 = vector.extract_strided_slice %193 {offsets = [0, 64], sizes = [2, 32], strides = [1, 1]} : vector<2x128xf32> to vector<2x32xf32>
    %cst_47 = arith.constant 2.000000e+00 : f32
    %197 = vector.broadcast %cst_47 : f32 to vector<2x32xf32>
    %198 = arith.mulf %197, %196 : vector<2x32xf32>
    %cst_48 = arith.constant 1.000000e+00 : f32
    %199 = vector.broadcast %cst_48 : f32 to vector<2x32xf32>
    %200 = arith.subf %198, %199 : vector<2x32xf32>
    %201 = vector.extract_strided_slice %193 {offsets = [0, 96], sizes = [2, 32], strides = [1, 1]} : vector<2x128xf32> to vector<2x32xf32>
    %202 = arith.mulf %195, %185 : vector<2x32xf32>
    %203 = arith.mulf %194, %200 : vector<2x32xf32>
    %204 = arith.addf %202, %203 : vector<2x32xf32>
    %205 = math.tanh %204 : vector<2x32xf32>
    %206 = arith.mulf %201, %205 : vector<2x32xf32>
    %207 = vector.extract_strided_slice %183 {offsets = [2, 0], sizes = [2, 128], strides = [1, 1]} : vector<16x128xf32> to vector<2x128xf32>
    %cst_49 = arith.constant dense<0.000000e+00> : vector<2x128xf32>
    %208 = tpu.matmul %206, %179, %cst_49 {dimension_numbers = #tpu.dot_dimension_numbers<[1], [0], [0], [1], [0, 0, 1, 1], [], []>} : vector<2x32xf32>, vector<32x128xf32>, vector<2x128xf32> -> vector<2x128xf32>
    %209 = arith.addf %207, %208 : vector<2x128xf32>
    %210 = arith.negf %209 : vector<2x128xf32>
    %211 = math.exp %210 : vector<2x128xf32>
    %cst_50 = arith.constant 1.000000e+00 : f32
    %212 = vector.broadcast %cst_50 : f32 to vector<2x128xf32>
    %213 = arith.addf %212, %211 : vector<2x128xf32>
    %214 = arith.divf %212, %213 : vector<2x128xf32>
    %215 = vector.extract_strided_slice %214 {offsets = [0, 0], sizes = [2, 32], strides = [1, 1]} : vector<2x128xf32> to vector<2x32xf32>
    %216 = vector.extract_strided_slice %214 {offsets = [0, 32], sizes = [2, 32], strides = [1, 1]} : vector<2x128xf32> to vector<2x32xf32>
    %217 = vector.extract_strided_slice %214 {offsets = [0, 64], sizes = [2, 32], strides = [1, 1]} : vector<2x128xf32> to vector<2x32xf32>
    %cst_51 = arith.constant 2.000000e+00 : f32
    %218 = vector.broadcast %cst_51 : f32 to vector<2x32xf32>
    %219 = arith.mulf %218, %217 : vector<2x32xf32>
    %cst_52 = arith.constant 1.000000e+00 : f32
    %220 = vector.broadcast %cst_52 : f32 to vector<2x32xf32>
    %221 = arith.subf %219, %220 : vector<2x32xf32>
    %222 = vector.extract_strided_slice %214 {offsets = [0, 96], sizes = [2, 32], strides = [1, 1]} : vector<2x128xf32> to vector<2x32xf32>
    %223 = arith.mulf %216, %204 : vector<2x32xf32>
    %224 = arith.mulf %215, %221 : vector<2x32xf32>
    %225 = arith.addf %223, %224 : vector<2x32xf32>
    %226 = math.tanh %225 : vector<2x32xf32>
    %227 = arith.mulf %222, %226 : vector<2x32xf32>
    %228 = vector.extract_strided_slice %183 {offsets = [4, 0], sizes = [2, 128], strides = [1, 1]} : vector<16x128xf32> to vector<2x128xf32>
    %cst_53 = arith.constant dense<0.000000e+00> : vector<2x128xf32>
    %229 = tpu.matmul %227, %179, %cst_53 {dimension_numbers = #tpu.dot_dimension_numbers<[1], [0], [0], [1], [0, 0, 1, 1], [], []>} : vector<2x32xf32>, vector<32x128xf32>, vector<2x128xf32> -> vector<2x128xf32>
    %230 = arith.addf %228, %229 : vector<2x128xf32>
    %231 = arith.negf %230 : vector<2x128xf32>
    %232 = math.exp %231 : vector<2x128xf32>
    %cst_54 = arith.constant 1.000000e+00 : f32
    %233 = vector.broadcast %cst_54 : f32 to vector<2x128xf32>
    %234 = arith.addf %233, %232 : vector<2x128xf32>
    %235 = arith.divf %233, %234 : vector<2x128xf32>
    %236 = vector.extract_strided_slice %235 {offsets = [0, 0], sizes = [2, 32], strides = [1, 1]} : vector<2x128xf32> to vector<2x32xf32>
    %237 = vector.extract_strided_slice %235 {offsets = [0, 32], sizes = [2, 32], strides = [1, 1]} : vector<2x128xf32> to vector<2x32xf32>
    %238 = vector.extract_strided_slice %235 {offsets = [0, 64], sizes = [2, 32], strides = [1, 1]} : vector<2x128xf32> to vector<2x32xf32>
    %cst_55 = arith.constant 2.000000e+00 : f32
    %239 = vector.broadcast %cst_55 : f32 to vector<2x32xf32>
    %240 = arith.mulf %239, %238 : vector<2x32xf32>
    %cst_56 = arith.constant 1.000000e+00 : f32
    %241 = vector.broadcast %cst_56 : f32 to vector<2x32xf32>
    %242 = arith.subf %240, %241 : vector<2x32xf32>
    %243 = vector.extract_strided_slice %235 {offsets = [0, 96], sizes = [2, 32], strides = [1, 1]} : vector<2x128xf32> to vector<2x32xf32>
    %244 = arith.mulf %237, %225 : vector<2x32xf32>
    %245 = arith.mulf %236, %242 : vector<2x32xf32>
    %246 = arith.addf %244, %245 : vector<2x32xf32>
    %247 = math.tanh %246 : vector<2x32xf32>
    %248 = arith.mulf %243, %247 : vector<2x32xf32>
    %249 = vector.extract_strided_slice %183 {offsets = [6, 0], sizes = [2, 128], strides = [1, 1]} : vector<16x128xf32> to vector<2x128xf32>
    %cst_57 = arith.constant dense<0.000000e+00> : vector<2x128xf32>
    %250 = tpu.matmul %248, %179, %cst_57 {dimension_numbers = #tpu.dot_dimension_numbers<[1], [0], [0], [1], [0, 0, 1, 1], [], []>} : vector<2x32xf32>, vector<32x128xf32>, vector<2x128xf32> -> vector<2x128xf32>
    %251 = arith.addf %249, %250 : vector<2x128xf32>
    %252 = arith.negf %251 : vector<2x128xf32>
    %253 = math.exp %252 : vector<2x128xf32>
    %cst_58 = arith.constant 1.000000e+00 : f32
    %254 = vector.broadcast %cst_58 : f32 to vector<2x128xf32>
    %255 = arith.addf %254, %253 : vector<2x128xf32>
    %256 = arith.divf %254, %255 : vector<2x128xf32>
    %257 = vector.extract_strided_slice %256 {offsets = [0, 0], sizes = [2, 32], strides = [1, 1]} : vector<2x128xf32> to vector<2x32xf32>
    %258 = vector.extract_strided_slice %256 {offsets = [0, 32], sizes = [2, 32], strides = [1, 1]} : vector<2x128xf32> to vector<2x32xf32>
    %259 = vector.extract_strided_slice %256 {offsets = [0, 64], sizes = [2, 32], strides = [1, 1]} : vector<2x128xf32> to vector<2x32xf32>
    %cst_59 = arith.constant 2.000000e+00 : f32
    %260 = vector.broadcast %cst_59 : f32 to vector<2x32xf32>
    %261 = arith.mulf %260, %259 : vector<2x32xf32>
    %cst_60 = arith.constant 1.000000e+00 : f32
    %262 = vector.broadcast %cst_60 : f32 to vector<2x32xf32>
    %263 = arith.subf %261, %262 : vector<2x32xf32>
    %264 = vector.extract_strided_slice %256 {offsets = [0, 96], sizes = [2, 32], strides = [1, 1]} : vector<2x128xf32> to vector<2x32xf32>
    %265 = arith.mulf %258, %246 : vector<2x32xf32>
    %266 = arith.mulf %257, %263 : vector<2x32xf32>
    %267 = arith.addf %265, %266 : vector<2x32xf32>
    %268 = math.tanh %267 : vector<2x32xf32>
    %269 = arith.mulf %264, %268 : vector<2x32xf32>
    %270 = vector.extract_strided_slice %183 {offsets = [8, 0], sizes = [2, 128], strides = [1, 1]} : vector<16x128xf32> to vector<2x128xf32>
    %cst_61 = arith.constant dense<0.000000e+00> : vector<2x128xf32>
    %271 = tpu.matmul %269, %179, %cst_61 {dimension_numbers = #tpu.dot_dimension_numbers<[1], [0], [0], [1], [0, 0, 1, 1], [], []>} : vector<2x32xf32>, vector<32x128xf32>, vector<2x128xf32> -> vector<2x128xf32>
    %272 = arith.addf %270, %271 : vector<2x128xf32>
    %273 = arith.negf %272 : vector<2x128xf32>
    %274 = math.exp %273 : vector<2x128xf32>
    %cst_62 = arith.constant 1.000000e+00 : f32
    %275 = vector.broadcast %cst_62 : f32 to vector<2x128xf32>
    %276 = arith.addf %275, %274 : vector<2x128xf32>
    %277 = arith.divf %275, %276 : vector<2x128xf32>
    %278 = vector.extract_strided_slice %277 {offsets = [0, 0], sizes = [2, 32], strides = [1, 1]} : vector<2x128xf32> to vector<2x32xf32>
    %279 = vector.extract_strided_slice %277 {offsets = [0, 32], sizes = [2, 32], strides = [1, 1]} : vector<2x128xf32> to vector<2x32xf32>
    %280 = vector.extract_strided_slice %277 {offsets = [0, 64], sizes = [2, 32], strides = [1, 1]} : vector<2x128xf32> to vector<2x32xf32>
    %cst_63 = arith.constant 2.000000e+00 : f32
    %281 = vector.broadcast %cst_63 : f32 to vector<2x32xf32>
    %282 = arith.mulf %281, %280 : vector<2x32xf32>
    %cst_64 = arith.constant 1.000000e+00 : f32
    %283 = vector.broadcast %cst_64 : f32 to vector<2x32xf32>
    %284 = arith.subf %282, %283 : vector<2x32xf32>
    %285 = vector.extract_strided_slice %277 {offsets = [0, 96], sizes = [2, 32], strides = [1, 1]} : vector<2x128xf32> to vector<2x32xf32>
    %286 = arith.mulf %279, %267 : vector<2x32xf32>
    %287 = arith.mulf %278, %284 : vector<2x32xf32>
    %288 = arith.addf %286, %287 : vector<2x32xf32>
    %289 = math.tanh %288 : vector<2x32xf32>
    %290 = arith.mulf %285, %289 : vector<2x32xf32>
    %291 = vector.extract_strided_slice %183 {offsets = [10, 0], sizes = [2, 128], strides = [1, 1]} : vector<16x128xf32> to vector<2x128xf32>
    %cst_65 = arith.constant dense<0.000000e+00> : vector<2x128xf32>
    %292 = tpu.matmul %290, %179, %cst_65 {dimension_numbers = #tpu.dot_dimension_numbers<[1], [0], [0], [1], [0, 0, 1, 1], [], []>} : vector<2x32xf32>, vector<32x128xf32>, vector<2x128xf32> -> vector<2x128xf32>
    %293 = arith.addf %291, %292 : vector<2x128xf32>
    %294 = arith.negf %293 : vector<2x128xf32>
    %295 = math.exp %294 : vector<2x128xf32>
    %cst_66 = arith.constant 1.000000e+00 : f32
    %296 = vector.broadcast %cst_66 : f32 to vector<2x128xf32>
    %297 = arith.addf %296, %295 : vector<2x128xf32>
    %298 = arith.divf %296, %297 : vector<2x128xf32>
    %299 = vector.extract_strided_slice %298 {offsets = [0, 0], sizes = [2, 32], strides = [1, 1]} : vector<2x128xf32> to vector<2x32xf32>
    %300 = vector.extract_strided_slice %298 {offsets = [0, 32], sizes = [2, 32], strides = [1, 1]} : vector<2x128xf32> to vector<2x32xf32>
    %301 = vector.extract_strided_slice %298 {offsets = [0, 64], sizes = [2, 32], strides = [1, 1]} : vector<2x128xf32> to vector<2x32xf32>
    %cst_67 = arith.constant 2.000000e+00 : f32
    %302 = vector.broadcast %cst_67 : f32 to vector<2x32xf32>
    %303 = arith.mulf %302, %301 : vector<2x32xf32>
    %cst_68 = arith.constant 1.000000e+00 : f32
    %304 = vector.broadcast %cst_68 : f32 to vector<2x32xf32>
    %305 = arith.subf %303, %304 : vector<2x32xf32>
    %306 = vector.extract_strided_slice %298 {offsets = [0, 96], sizes = [2, 32], strides = [1, 1]} : vector<2x128xf32> to vector<2x32xf32>
    %307 = arith.mulf %300, %288 : vector<2x32xf32>
    %308 = arith.mulf %299, %305 : vector<2x32xf32>
    %309 = arith.addf %307, %308 : vector<2x32xf32>
    %310 = math.tanh %309 : vector<2x32xf32>
    %311 = arith.mulf %306, %310 : vector<2x32xf32>
    %312 = vector.extract_strided_slice %183 {offsets = [12, 0], sizes = [2, 128], strides = [1, 1]} : vector<16x128xf32> to vector<2x128xf32>
    %cst_69 = arith.constant dense<0.000000e+00> : vector<2x128xf32>
    %313 = tpu.matmul %311, %179, %cst_69 {dimension_numbers = #tpu.dot_dimension_numbers<[1], [0], [0], [1], [0, 0, 1, 1], [], []>} : vector<2x32xf32>, vector<32x128xf32>, vector<2x128xf32> -> vector<2x128xf32>
    %314 = arith.addf %312, %313 : vector<2x128xf32>
    %315 = arith.negf %314 : vector<2x128xf32>
    %316 = math.exp %315 : vector<2x128xf32>
    %cst_70 = arith.constant 1.000000e+00 : f32
    %317 = vector.broadcast %cst_70 : f32 to vector<2x128xf32>
    %318 = arith.addf %317, %316 : vector<2x128xf32>
    %319 = arith.divf %317, %318 : vector<2x128xf32>
    %320 = vector.extract_strided_slice %319 {offsets = [0, 0], sizes = [2, 32], strides = [1, 1]} : vector<2x128xf32> to vector<2x32xf32>
    %321 = vector.extract_strided_slice %319 {offsets = [0, 32], sizes = [2, 32], strides = [1, 1]} : vector<2x128xf32> to vector<2x32xf32>
    %322 = vector.extract_strided_slice %319 {offsets = [0, 64], sizes = [2, 32], strides = [1, 1]} : vector<2x128xf32> to vector<2x32xf32>
    %cst_71 = arith.constant 2.000000e+00 : f32
    %323 = vector.broadcast %cst_71 : f32 to vector<2x32xf32>
    %324 = arith.mulf %323, %322 : vector<2x32xf32>
    %cst_72 = arith.constant 1.000000e+00 : f32
    %325 = vector.broadcast %cst_72 : f32 to vector<2x32xf32>
    %326 = arith.subf %324, %325 : vector<2x32xf32>
    %327 = vector.extract_strided_slice %319 {offsets = [0, 96], sizes = [2, 32], strides = [1, 1]} : vector<2x128xf32> to vector<2x32xf32>
    %328 = arith.mulf %321, %309 : vector<2x32xf32>
    %329 = arith.mulf %320, %326 : vector<2x32xf32>
    %330 = arith.addf %328, %329 : vector<2x32xf32>
    %331 = math.tanh %330 : vector<2x32xf32>
    %332 = arith.mulf %327, %331 : vector<2x32xf32>
    %333 = vector.extract_strided_slice %183 {offsets = [14, 0], sizes = [2, 128], strides = [1, 1]} : vector<16x128xf32> to vector<2x128xf32>
    %cst_73 = arith.constant dense<0.000000e+00> : vector<2x128xf32>
    %334 = tpu.matmul %332, %179, %cst_73 {dimension_numbers = #tpu.dot_dimension_numbers<[1], [0], [0], [1], [0, 0, 1, 1], [], []>} : vector<2x32xf32>, vector<32x128xf32>, vector<2x128xf32> -> vector<2x128xf32>
    %335 = arith.addf %333, %334 : vector<2x128xf32>
    %336 = arith.negf %335 : vector<2x128xf32>
    %337 = math.exp %336 : vector<2x128xf32>
    %cst_74 = arith.constant 1.000000e+00 : f32
    %338 = vector.broadcast %cst_74 : f32 to vector<2x128xf32>
    %339 = arith.addf %338, %337 : vector<2x128xf32>
    %340 = arith.divf %338, %339 : vector<2x128xf32>
    %341 = vector.extract_strided_slice %340 {offsets = [0, 0], sizes = [2, 32], strides = [1, 1]} : vector<2x128xf32> to vector<2x32xf32>
    %342 = vector.extract_strided_slice %340 {offsets = [0, 32], sizes = [2, 32], strides = [1, 1]} : vector<2x128xf32> to vector<2x32xf32>
    %343 = vector.extract_strided_slice %340 {offsets = [0, 64], sizes = [2, 32], strides = [1, 1]} : vector<2x128xf32> to vector<2x32xf32>
    %cst_75 = arith.constant 2.000000e+00 : f32
    %344 = vector.broadcast %cst_75 : f32 to vector<2x32xf32>
    %345 = arith.mulf %344, %343 : vector<2x32xf32>
    %cst_76 = arith.constant 1.000000e+00 : f32
    %346 = vector.broadcast %cst_76 : f32 to vector<2x32xf32>
    %347 = arith.subf %345, %346 : vector<2x32xf32>
    %348 = vector.extract_strided_slice %340 {offsets = [0, 96], sizes = [2, 32], strides = [1, 1]} : vector<2x128xf32> to vector<2x32xf32>
    %349 = arith.mulf %342, %330 : vector<2x32xf32>
    %350 = arith.mulf %341, %347 : vector<2x32xf32>
    %351 = arith.addf %349, %350 : vector<2x32xf32>
    %352 = math.tanh %351 : vector<2x32xf32>
    %353 = arith.mulf %348, %352 : vector<2x32xf32>
    %c120 = arith.constant 120 : index
    %c0_77 = arith.constant 0 : index
    %354 = vector.load %arg1[%c120, %c0_77] : memref<128x128xf32, #tpu.memory_space<vmem>>, vector<1x32xf32>
    %c121 = arith.constant 121 : index
    %c0_78 = arith.constant 0 : index
    %355 = vector.load %arg1[%c121, %c0_78] : memref<128x128xf32, #tpu.memory_space<vmem>>, vector<1x1xf32>
    %356 = vector.broadcast %354 : vector<1x32xf32> to vector<2x32xf32>
    %357 = arith.mulf %353, %356 : vector<2x32xf32>
    %cst_79 = arith.constant dense<0.000000e+00> : vector<2xf32>
    %358 = vector.multi_reduction <add>, %357, %cst_79 [1] : vector<2x32xf32> to vector<2xf32>
    %359 = vector.shape_cast %358 : vector<2xf32> to vector<2x1xf32>
    %360 = vector.broadcast %355 : vector<1x1xf32> to vector<2x1xf32>
    %361 = arith.addf %359, %360 : vector<2x1xf32>
    %c0_80 = arith.constant 0 : index
    %c0_81 = arith.constant 0 : index
    %362 = vector.load %arg2[%c0_80, %c0_81] : memref<2x1xf32, #tpu.memory_space<vmem>>, vector<2x1xf32>
    tpu.vector_store %arg2[%c0_80, %c0_81], %361 {strides = array<i32>} : memref<2x1xf32, #tpu.memory_space<vmem>>, vector<2x1xf32>,
    return
  }
}

</mosaic_0001>

<llo_original>
// kernel: stock_price_regressor_forward.1
$region0: #{stock_price_regressor_forward.1}
  #allocation0 [shape = 'u32[]', space=smem, size = 0x4, offset = 0x4, fixed_abs, tag = 'smem constant byte address 0x4 - core index']
  #allocation1 [shape = 'u32[144,128]{1,0:T(1,128)}', space=vmem, size = 0x12000, scoped, tag = 'internal scratch']
  %s0 = inlined_call_operand.vmem [shape: f32[16,8], index: 0, kind: input, shape index: {}]
  %s1 = inlined_call_operand.hbm [shape: f32[128,128], index: 1, kind: input, shape index: {}]
  %s2 = inlined_call_operand.vmem [shape: f32[2,1], index: 2, kind: output, shape index: {}]
  %s3 = sld [smem:[#allocation0]]
  $region22: #{stock_price_regressor_forward.1} parent=0
    _
  %s5 = ssub.s32 1, %s3
  %s6 = scalar_select 0, %s5, %s3
  $region1: #{stock_price_regressor_forward.1} parent=0
    #allocation2 [shape = 'u8[65536]{0}', space=vmem, size = 0x10000, scoped, tag = 'input window, operand 1, single buffered']
    #allocation3 [shape = 's32[1]{0}', space=sflag, size = 0x4, scoped, tag = 'scoped memory for stock_price_regressor_forward.1']
    %7 = vsyncpa [#allocation3], 0
    // Predicated region
    $region2: #{stock_price_regressor_forward.1} parent=1 // pred_check
      _
    $region3: #{stock_price_regressor_forward.1} parent=1 // pred_check_branch
      %9 = sbr.rel (0) target = $region5
    $region4: #{stock_price_regressor_forward.1} parent=1 // pred_region
      _
    $region5: #{stock_price_regressor_forward.1} parent=1 // pred_fallthru
      _
    // Predicated region
    $region6: #{stock_price_regressor_forward.1} parent=1 // pred_check
      _
    $region7: #{stock_price_regressor_forward.1} parent=1 // pred_check_branch
      %11 = sbr.rel (0) target = $region9
    $region8: #{stock_price_regressor_forward.1} parent=1 // pred_region
      %s13 = ssub.s32 2048, 2048
      %14 = vsyncadd [#allocation3], %s13
      %s15 = sshll.u32 [#allocation2], 4
      %s16 = int_to_ptr.vmem [resolvable:$true] %s15
      %21 = dma.hbm_to_vmem [thread:$0]  %s1, 2048, %s16, [#allocation3], 128, 128, 8
    $region9: #{stock_price_regressor_forward.1} parent=1 // pred_fallthru
      _
    // Predicated region
    $region10: #{stock_price_regressor_forward.1} parent=1 // pred_check
      _
    $region11: #{stock_price_regressor_forward.1} parent=1 // pred_check_branch
      %23 = sbr.rel (0) target = $region13
    $region12: #{stock_price_regressor_forward.1} parent=1 // pred_region
      %24 = dma.done [#allocation3], 2048
    $region13: #{stock_price_regressor_forward.1} parent=1 // pred_fallthru
      _
    %v25 = vld [vmem:[%s0] sm:$0xff]
    %v26 = vld [vmem:[%s0 + $0x8] sm:$0xff]
    %v27 = vld [vmem:[#allocation2] sm:$0xff]
    %v28 = vld [vmem:[#allocation2 + $0x8] sm:$0xff]
    %v29 = vld [vmem:[#allocation2 + $0x10] sm:$0xff]
    %v30 = vld [vmem:[#allocation2 + $0x18] sm:$0xff]
    %v31 = vld [vmem:[#allocation2 + $0x20] sm:$0xff]
    %v32 = vld [vmem:[#allocation2 + $0x28] sm:$0x1]
    %v33 = vlaneseq
    %v34 = vshrl.u32 %v33, 7
    %v35 = vsub.s32 0, %v34
    %v36 = vrot.slane %v32, %v35
    %vm37 = vcmask 64512
    %v39 = vsel %vm37, %v25, 0
    %v42 = vsel %vm37, %v26, 0
    %44 = vmatprep.subr.mxu0 0.0
    %45 = vmatpush1.msra.mxu0 %v27
    %46 = vmatprep.subr.mxu0 0.0
    %47 = vmatpush1.msra.mxu0 0.0
    %48 = vmatprep.subr.mxu0 0.0
    %49 = vmatpush1.msra.mxu0 0.0
    %50 = vmatprep.subr.mxu0 0.0
    %51 = vmatpush1.msra.mxu0 0.0
    %52 = vmatprep.subr.mxu0 0.0
    %53 = vmatpush1.msra.mxu0 0.0
    %54 = vmatprep.subr.mxu0 0.0
    %55 = vmatpush1.msra.mxu0 0.0
    %56 = vmatprep.subr.mxu0 0.0
    %57 = vmatpush1.msra.mxu0 0.0
    %58 = vmatprep.subr.mxu0 0.0
    %59 = vmatpush1.msra.mxu0 0.0
    %60 = vmatprep.subr.mxu0 0.0
    %61 = vmatpush1.msra.mxu0 0.0
    %62 = vmatprep.subr.mxu0 0.0
    %63 = vmatpush1.msra.mxu0 0.0
    %64 = vmatprep.subr.mxu0 0.0
    %65 = vmatpush1.msra.mxu0 0.0
    %66 = vmatprep.subr.mxu0 0.0
    %67 = vmatpush1.msra.mxu0 0.0
    %68 = vmatprep.subr.mxu0 0.0
    %69 = vmatpush1.msra.mxu0 0.0
    %70 = vmatprep.subr.mxu0 0.0
    %71 = vmatpush1.msra.mxu0 0.0
    %72 = vmatprep.subr.mxu0 0.0
    %73 = vmatpush1.msra.mxu0 0.0
    %74 = vmatprep.subr.mxu0 0.0
    %75 = vmatpush1.msra.mxu0 0.0
    %76 = vmatprep.subr.mxu0 0.0
    %77 = vmatpush1.msra.mxu0 0.0
    %78 = vmatprep.subr.mxu0 0.0
    %79 = vmatpush1.msra.mxu0 0.0
    %80 = vmatprep.subr.mxu0 0.0
    %81 = vmatpush1.msra.mxu0 0.0
    %82 = vmatprep.subr.mxu0 0.0
    %83 = vmatpush1.msra.mxu0 0.0
    %84 = vmatprep.subr.mxu0 0.0
    %85 = vmatpush1.msra.mxu0 0.0
    %86 = vmatprep.subr.mxu0 0.0
    %87 = vmatpush1.msra.mxu0 0.0
    %88 = vmatprep.subr.mxu0 0.0
    %89 = vmatpush1.msra.mxu0 0.0
    %90 = vmatprep.subr.mxu0 0.0
    %91 = vmatpush1.msra.mxu0 0.0
    %92 = vmatprep.subr.mxu0 0.0
    %93 = vmatpush1.msra.mxu0 0.0
    %94 = vmatprep.subr.mxu0 0.0
    %95 = vmatpush1.msra.mxu0 0.0
    %96 = vmatprep.subr.mxu0 0.0
    %97 = vmatpush1.msra.mxu0 0.0
    %98 = vmatprep.subr.mxu0 0.0
    %99 = vmatpush1.msra.mxu0 0.0
    %100 = vmatprep.subr.mxu0 0.0
    %101 = vmatpush1.msra.mxu0 0.0
    %102 = vmatprep.subr.mxu0 0.0
    %103 = vmatpush1.msra.mxu0 0.0
    %104 = vmatprep.subr.mxu0 0.0
    %105 = vmatpush1.msra.mxu0 0.0
    %106 = vmatprep.subr.mxu0 0.0
    %107 = vmatpush1.msra.mxu0 0.0
    %108 = vmatprep.mubr.f32.mxu0 0.0
    %109 = vmatmul.mubr.f32.gmra.mrb[0].mxu0 %v39
    %v110 = vpop.f32.mrb[0].mxu0
    %v111 = vadd.f32 %v36, %v110
    %v112 = vpop.f32.mrb[0].mxu0
    %113 = vmatprep.mubr.f32.mxu0 0.0
    %114 = vmatmul.mubr.f32.gmra.mrb[0].mxu0 %v42
    %v115 = vpop.f32.mrb[0].mxu0
    %v116 = vadd.f32 %v36, %v115
    %v117 = vpop.f32.mrb[0].mxu0
    %118 = vdwg.mxu0
    %vm119 = vcmask 261120
    %v121 = vsel %vm119, 0.0, 0
    %123 = vmatprep.subr.mxu0 0.0
    %124 = vmatpush1.msra.mxu0 %v28
    %125 = vmatprep.subr.mxu0 0.0
    %126 = vmatpush1.msra.mxu0 %v29
    %127 = vmatprep.subr.mxu0 0.0
    %128 = vmatpush1.msra.mxu0 %v30
    %129 = vmatprep.subr.mxu0 0.0
    %130 = vmatpush1.msra.mxu0 %v31
    %131 = vmatprep.subr.mxu0 0.0
    %132 = vmatpush1.msra.mxu0 0.0
    %133 = vmatprep.subr.mxu0 0.0
    %134 = vmatpush1.msra.mxu0 0.0
    %135 = vmatprep.subr.mxu0 0.0
    %136 = vmatpush1.msra.mxu0 0.0
    %137 = vmatprep.subr.mxu0 0.0
    %138 = vmatpush1.msra.mxu0 0.0
    %139 = vmatprep.subr.mxu0 0.0
    %140 = vmatpush1.msra.mxu0 0.0
    %141 = vmatprep.subr.mxu0 0.0
    %142 = vmatpush1.msra.mxu0 0.0
    %143 = vmatprep.subr.mxu0 0.0
    %144 = vmatpush1.msra.mxu0 0.0
    %145 = vmatprep.subr.mxu0 0.0
    %146 = vmatpush1.msra.mxu0 0.0
    %147 = vmatprep.subr.mxu0 0.0
    %148 = vmatpush1.msra.mxu0 0.0
    %149 = vmatprep.subr.mxu0 0.0
    %150 = vmatpush1.msra.mxu0 0.0
    %151 = vmatprep.subr.mxu0 0.0
    %152 = vmatpush1.msra.mxu0 0.0
    %153 = vmatprep.subr.mxu0 0.0
    %154 = vmatpush1.msra.mxu0 0.0
    %155 = vmatprep.subr.mxu0 0.0
    %156 = vmatpush1.msra.mxu0 0.0
    %157 = vmatprep.subr.mxu0 0.0
    %158 = vmatpush1.msra.mxu0 0.0
    %159 = vmatprep.subr.mxu0 0.0
    %160 = vmatpush1.msra.mxu0 0.0
    %161 = vmatprep.subr.mxu0 0.0
    %162 = vmatpush1.msra.mxu0 0.0
    %163 = vmatprep.subr.mxu0 0.0
    %164 = vmatpush1.msra.mxu0 0.0
    %165 = vmatprep.subr.mxu0 0.0
    %166 = vmatpush1.msra.mxu0 0.0
    %167 = vmatprep.subr.mxu0 0.0
    %168 = vmatpush1.msra.mxu0 0.0
    %169 = vmatprep.subr.mxu0 0.0
    %170 = vmatpush1.msra.mxu0 0.0
    %171 = vmatprep.subr.mxu0 0.0
    %172 = vmatpush1.msra.mxu0 0.0
    %173 = vmatprep.subr.mxu0 0.0
    %174 = vmatpush1.msra.mxu0 0.0
    %175 = vmatprep.subr.mxu0 0.0
    %176 = vmatpush1.msra.mxu0 0.0
    %177 = vmatprep.subr.mxu0 0.0
    %178 = vmatpush1.msra.mxu0 0.0
    %179 = vmatprep.subr.mxu0 0.0
    %180 = vmatpush1.msra.mxu0 0.0
    %181 = vmatprep.subr.mxu0 0.0
    %182 = vmatpush1.msra.mxu0 0.0
    %183 = vmatprep.subr.mxu0 0.0
    %184 = vmatpush1.msra.mxu0 0.0
    %185 = vmatprep.subr.mxu0 0.0
    %186 = vmatpush1.msra.mxu0 0.0
    %187 = vmatprep.mubr.f32.mxu0 0.0
    %188 = vmatmul.mubr.f32.gmra.mrb[0].mxu0 %v121
    %v189 = vpop.f32.mrb[0].mxu0
    %v190 = vadd.f32 0.0, %v189
    %v191 = vpop.f32.mrb[0].mxu0
    %192 = vdwg.mxu0
    %v193 = vadd.f32 %v111, %v190
    %v194 = vxor.u32 %v193, 2147483648
    %v195 = vmul.f32 %v194, 1.442695
    %v196 = vpow.pop %v195
    %v197 = vadd.f32 %v196, 1.0
    %v198 = vrcp.pop %v197
    %v199 = vmul.f32 1.0, %v198
    %v200 = vmul.f32 %v199, 2.0
    %v201 = vsub.f32 %v200, 1.0
    %v202 = vmul.f32 %v199, 0.0
    %204 = vrot.lane.b32.xlu0 %v201, 64
    %v205 = vpop.permute.xlu0 %204
    %v207 = vmul.f32 %v199, %v205
    %209 = vrot.lane.b32.xlu0 %v207, 32
    %v210 = vpop.permute.xlu0 %209
    %v212 = vadd.f32 %v202, %v210
    %v213 = vtanh.pop %v212
    %215 = vrot.lane.b32.xlu0 %v213, 64
    %v216 = vpop.permute.xlu0 %215
    %v218 = vmul.f32 %v199, %v216
    %220 = vrot.lane.b32.xlu0 %v218, 32
    %v221 = vpop.permute.xlu0 %220
    %v222 = vsel %vm119, %v221, 0
    %224 = vmatprep.subr.mxu0 0.0
    %225 = vmatpush1.msra.mxu0 %v28
    %226 = vmatprep.subr.mxu0 0.0
    %227 = vmatpush1.msra.mxu0 %v29
    %228 = vmatprep.subr.mxu0 0.0
    %229 = vmatpush1.msra.mxu0 %v30
    %230 = vmatprep.subr.mxu0 0.0
    %231 = vmatpush1.msra.mxu0 %v31
    %232 = vmatprep.subr.mxu0 0.0
    %233 = vmatpush1.msra.mxu0 0.0
    %234 = vmatprep.subr.mxu0 0.0
    %235 = vmatpush1.msra.mxu0 0.0
    %236 = vmatprep.subr.mxu0 0.0
    %237 = vmatpush1.msra.mxu0 0.0
    %238 = vmatprep.subr.mxu0 0.0
    %239 = vmatpush1.msra.mxu0 0.0
    %240 = vmatprep.subr.mxu0 0.0
    %241 = vmatpush1.msra.mxu0 0.0
    %242 = vmatprep.subr.mxu0 0.0
    %243 = vmatpush1.msra.mxu0 0.0
    %244 = vmatprep.subr.mxu0 0.0
    %245 = vmatpush1.msra.mxu0 0.0
    %246 = vmatprep.subr.mxu0 0.0
    %247 = vmatpush1.msra.mxu0 0.0
    %248 = vmatprep.subr.mxu0 0.0
    %249 = vmatpush1.msra.mxu0 0.0
    %250 = vmatprep.subr.mxu0 0.0
    %251 = vmatpush1.msra.mxu0 0.0
    %252 = vmatprep.subr.mxu0 0.0
    %253 = vmatpush1.msra.mxu0 0.0
    %254 = vmatprep.subr.mxu0 0.0
    %255 = vmatpush1.msra.mxu0 0.0
    %256 = vmatprep.subr.mxu0 0.0
    %257 = vmatpush1.msra.mxu0 0.0
    %258 = vmatprep.subr.mxu0 0.0
    %259 = vmatpush1.msra.mxu0 0.0
    %260 = vmatprep.subr.mxu0 0.0
    %261 = vmatpush1.msra.mxu0 0.0
    %262 = vmatprep.subr.mxu0 0.0
    %263 = vmatpush1.msra.mxu0 0.0
    %264 = vmatprep.subr.mxu0 0.0
    %265 = vmatpush1.msra.mxu0 0.0
    %266 = vmatprep.subr.mxu0 0.0
    %267 = vmatpush1.msra.mxu0 0.0
    %268 = vmatprep.subr.mxu0 0.0
    %269 = vmatpush1.msra.mxu0 0.0
    %270 = vmatprep.subr.mxu0 0.0
    %271 = vmatpush1.msra.mxu0 0.0
    %272 = vmatprep.subr.mxu0 0.0
    %273 = vmatpush1.msra.mxu0 0.0
    %274 = vmatprep.subr.mxu0 0.0
    %275 = vmatpush1.msra.mxu0 0.0
    %276 = vmatprep.subr.mxu0 0.0
    %277 = vmatpush1.msra.mxu0 0.0
    %278 = vmatprep.subr.mxu0 0.0
    %279 = vmatpush1.msra.mxu0 0.0
    %280 = vmatprep.subr.mxu0 0.0
    %281 = vmatpush1.msra.mxu0 0.0
    %282 = vmatprep.subr.mxu0 0.0
    %283 = vmatpush1.msra.mxu0 0.0
    %284 = vmatprep.subr.mxu0 0.0
    %285 = vmatpush1.msra.mxu0 0.0
    %286 = vmatprep.subr.mxu0 0.0
    %287 = vmatpush1.msra.mxu0 0.0
    %288 = vmatprep.mubr.f32.mxu0 0.0
    %289 = vmatmul.mubr.f32.gmra.mrb[0].mxu0 %v222
    %v290 = vpop.f32.mrb[0].mxu0
    %v291 = vadd.f32 0.0, %v290
    %v292 = vpop.f32.mrb[0].mxu0
    %293 = vdwg.mxu0
    %v295 = vrot.slane %v291, 6
    %v297 = vadd.f32 %v111, %v295
    %v298 = vxor.u32 %v297, 2147483648
    %v299 = vmul.f32 %v298, 1.442695
    %v300 = vpow.pop %v299
    %v301 = vadd.f32 %v300, 1.0
    %v302 = vrcp.pop %v301
    %v303 = vmul.f32 1.0, %v302
    %v304 = vmul.f32 %v303, 2.0
    %v305 = vsub.f32 %v304, 1.0
    %v307 = vrot.slane %v212, 6
    %v309 = vmul.f32 %v303, %v307
    %311 = vrot.lane.b32.xlu0 %v305, 64
    %v312 = vpop.permute.xlu0 %311
    %v314 = vmul.f32 %v303, %v312
    %316 = vrot.lane.b32.xlu0 %v314, 32
    %v317 = vpop.permute.xlu0 %316
    %v319 = vadd.f32 %v309, %v317
    %v320 = vtanh.pop %v319
    %322 = vrot.lane.b32.xlu0 %v320, 64
    %v323 = vpop.permute.xlu0 %322
    %v325 = vmul.f32 %v303, %v323
    %v327 = vrot.slane %v325, 2
    %328 = vrot.lane.b32.xlu0 %v327, 32
    %v329 = vpop.permute.xlu0 %328
    %v330 = vsel %vm119, %v329, 0
    %332 = vmatprep.subr.mxu0 0.0
    %333 = vmatpush1.msra.mxu0 %v28
    %334 = vmatprep.subr.mxu0 0.0
    %335 = vmatpush1.msra.mxu0 %v29
    %336 = vmatprep.subr.mxu0 0.0
    %337 = vmatpush1.msra.mxu0 %v30
    %338 = vmatprep.subr.mxu0 0.0
    %339 = vmatpush1.msra.mxu0 %v31
    %340 = vmatprep.subr.mxu0 0.0
    %341 = vmatpush1.msra.mxu0 0.0
    %342 = vmatprep.subr.mxu0 0.0
    %343 = vmatpush1.msra.mxu0 0.0
    %344 = vmatprep.subr.mxu0 0.0
    %345 = vmatpush1.msra.mxu0 0.0
    %346 = vmatprep.subr.mxu0 0.0
    %347 = vmatpush1.msra.mxu0 0.0
    %348 = vmatprep.subr.mxu0 0.0
    %349 = vmatpush1.msra.mxu0 0.0
    %350 = vmatprep.subr.mxu0 0.0
    %351 = vmatpush1.msra.mxu0 0.0
    %352 = vmatprep.subr.mxu0 0.0
    %353 = vmatpush1.msra.mxu0 0.0
    %354 = vmatprep.subr.mxu0 0.0
    %355 = vmatpush1.msra.mxu0 0.0
    %356 = vmatprep.subr.mxu0 0.0
    %357 = vmatpush1.msra.mxu0 0.0
    %358 = vmatprep.subr.mxu0 0.0
    %359 = vmatpush1.msra.mxu0 0.0
    %360 = vmatprep.subr.mxu0 0.0
    %361 = vmatpush1.msra.mxu0 0.0
    %362 = vmatprep.subr.mxu0 0.0
    %363 = vmatpush1.msra.mxu0 0.0
    %364 = vmatprep.subr.mxu0 0.0
    %365 = vmatpush1.msra.mxu0 0.0
    %366 = vmatprep.subr.mxu0 0.0
    %367 = vmatpush1.msra.mxu0 0.0
    %368 = vmatprep.subr.mxu0 0.0
    %369 = vmatpush1.msra.mxu0 0.0
    %370 = vmatprep.subr.mxu0 0.0
    %371 = vmatpush1.msra.mxu0 0.0
    %372 = vmatprep.subr.mxu0 0.0
    %373 = vmatpush1.msra.mxu0 0.0
    %374 = vmatprep.subr.mxu0 0.0
    %375 = vmatpush1.msra.mxu0 0.0
    %376 = vmatprep.subr.mxu0 0.0
    %377 = vmatpush1.msra.mxu0 0.0
    %378 = vmatprep.subr.mxu0 0.0
    %379 = vmatpush1.msra.mxu0 0.0
    %380 = vmatprep.subr.mxu0 0.0
    %381 = vmatpush1.msra.mxu0 0.0
    %382 = vmatprep.subr.mxu0 0.0
    %383 = vmatpush1.msra.mxu0 0.0
    %384 = vmatprep.subr.mxu0 0.0
    %385 = vmatpush1.msra.mxu0 0.0
    %386 = vmatprep.subr.mxu0 0.0
    %387 = vmatpush1.msra.mxu0 0.0
    %388 = vmatprep.subr.mxu0 0.0
    %389 = vmatpush1.msra.mxu0 0.0
    %390 = vmatprep.subr.mxu0 0.0
    %391 = vmatpush1.msra.mxu0 0.0
    %392 = vmatprep.subr.mxu0 0.0
    %393 = vmatpush1.msra.mxu0 0.0
    %394 = vmatprep.subr.mxu0 0.0
    %395 = vmatpush1.msra.mxu0 0.0
    %396 = vmatprep.mubr.f32.mxu0 0.0
    %397 = vmatmul.mubr.f32.gmra.mrb[0].mxu0 %v330
    %v398 = vpop.f32.mrb[0].mxu0
    %v399 = vadd.f32 0.0, %v398
    %v400 = vpop.f32.mrb[0].mxu0
    %401 = vdwg.mxu0
    %v403 = vrot.slane %v399, 4
    %v405 = vadd.f32 %v111, %v403
    %v406 = vxor.u32 %v405, 2147483648
    %v407 = vmul.f32 %v406, 1.442695
    %v408 = vpow.pop %v407
    %v409 = vadd.f32 %v408, 1.0
    %v410 = vrcp.pop %v409
    %v411 = vmul.f32 1.0, %v410
    %v412 = vmul.f32 %v411, 2.0
    %v413 = vsub.f32 %v412, 1.0
    %v415 = vrot.slane %v319, 6
    %v417 = vmul.f32 %v411, %v415
    %419 = vrot.lane.b32.xlu0 %v413, 64
    %v420 = vpop.permute.xlu0 %419
    %v422 = vmul.f32 %v411, %v420
    %424 = vrot.lane.b32.xlu0 %v422, 32
    %v425 = vpop.permute.xlu0 %424
    %v427 = vadd.f32 %v417, %v425
    %v428 = vtanh.pop %v427
    %430 = vrot.lane.b32.xlu0 %v428, 64
    %v431 = vpop.permute.xlu0 %430
    %v433 = vmul.f32 %v411, %v431
    %v435 = vrot.slane %v433, 4
    %436 = vrot.lane.b32.xlu0 %v435, 32
    %v437 = vpop.permute.xlu0 %436
    %v438 = vsel %vm119, %v437, 0
    %440 = vmatprep.subr.mxu0 0.0
    %441 = vmatpush1.msra.mxu0 %v28
    %442 = vmatprep.subr.mxu0 0.0
    %443 = vmatpush1.msra.mxu0 %v29
    %444 = vmatprep.subr.mxu0 0.0
    %445 = vmatpush1.msra.mxu0 %v30
    %446 = vmatprep.subr.mxu0 0.0
    %447 = vmatpush1.msra.mxu0 %v31
    %448 = vmatprep.subr.mxu0 0.0
    %449 = vmatpush1.msra.mxu0 0.0
    %450 = vmatprep.subr.mxu0 0.0
    %451 = vmatpush1.msra.mxu0 0.0
    %452 = vmatprep.subr.mxu0 0.0
    %453 = vmatpush1.msra.mxu0 0.0
    %454 = vmatprep.subr.mxu0 0.0
    %455 = vmatpush1.msra.mxu0 0.0
    %456 = vmatprep.subr.mxu0 0.0
    %457 = vmatpush1.msra.mxu0 0.0
    %458 = vmatprep.subr.mxu0 0.0
    %459 = vmatpush1.msra.mxu0 0.0
    %460 = vmatprep.subr.mxu0 0.0
    %461 = vmatpush1.msra.mxu0 0.0
    %462 = vmatprep.subr.mxu0 0.0
    %463 = vmatpush1.msra.mxu0 0.0
    %464 = vmatprep.subr.mxu0 0.0
    %465 = vmatpush1.msra.mxu0 0.0
    %466 = vmatprep.subr.mxu0 0.0
    %467 = vmatpush1.msra.mxu0 0.0
    %468 = vmatprep.subr.mxu0 0.0
    %469 = vmatpush1.msra.mxu0 0.0
    %470 = vmatprep.subr.mxu0 0.0
    %471 = vmatpush1.msra.mxu0 0.0
    %472 = vmatprep.subr.mxu0 0.0
    %473 = vmatpush1.msra.mxu0 0.0
    %474 = vmatprep.subr.mxu0 0.0
    %475 = vmatpush1.msra.mxu0 0.0
    %476 = vmatprep.subr.mxu0 0.0
    %477 = vmatpush1.msra.mxu0 0.0
    %478 = vmatprep.subr.mxu0 0.0
    %479 = vmatpush1.msra.mxu0 0.0
    %480 = vmatprep.subr.mxu0 0.0
    %481 = vmatpush1.msra.mxu0 0.0
    %482 = vmatprep.subr.mxu0 0.0
    %483 = vmatpush1.msra.mxu0 0.0
    %484 = vmatprep.subr.mxu0 0.0
    %485 = vmatpush1.msra.mxu0 0.0
    %486 = vmatprep.subr.mxu0 0.0
    %487 = vmatpush1.msra.mxu0 0.0
    %488 = vmatprep.subr.mxu0 0.0
    %489 = vmatpush1.msra.mxu0 0.0
    %490 = vmatprep.subr.mxu0 0.0
    %491 = vmatpush1.msra.mxu0 0.0
    %492 = vmatprep.subr.mxu0 0.0
    %493 = vmatpush1.msra.mxu0 0.0
    %494 = vmatprep.subr.mxu0 0.0
    %495 = vmatpush1.msra.mxu0 0.0
    %496 = vmatprep.subr.mxu0 0.0
    %497 = vmatpush1.msra.mxu0 0.0
    %498 = vmatprep.subr.mxu0 0.0
    %499 = vmatpush1.msra.mxu0 0.0
    %500 = vmatprep.subr.mxu0 0.0
    %501 = vmatpush1.msra.mxu0 0.0
    %502 = vmatprep.subr.mxu0 0.0
    %503 = vmatpush1.msra.mxu0 0.0
    %504 = vmatprep.mubr.f32.mxu0 0.0
    %505 = vmatmul.mubr.f32.gmra.mrb[0].mxu0 %v438
    %v506 = vpop.f32.mrb[0].mxu0
    %v507 = vadd.f32 0.0, %v506
    %v508 = vpop.f32.mrb[0].mxu0
    %509 = vdwg.mxu0
    %v511 = vrot.slane %v507, 2
    %v513 = vadd.f32 %v111, %v511
    %v514 = vxor.u32 %v513, 2147483648
    %v515 = vmul.f32 %v514, 1.442695
    %v516 = vpow.pop %v515
    %v517 = vadd.f32 %v516, 1.0
    %v518 = vrcp.pop %v517
    %v519 = vmul.f32 1.0, %v518
    %v520 = vmul.f32 %v519, 2.0
    %v521 = vsub.f32 %v520, 1.0
    %v523 = vrot.slane %v427, 6
    %v525 = vmul.f32 %v519, %v523
    %527 = vrot.lane.b32.xlu0 %v521, 64
    %v528 = vpop.permute.xlu0 %527
    %v530 = vmul.f32 %v519, %v528
    %532 = vrot.lane.b32.xlu0 %v530, 32
    %v533 = vpop.permute.xlu0 %532
    %v535 = vadd.f32 %v525, %v533
    %v536 = vtanh.pop %v535
    %538 = vrot.lane.b32.xlu0 %v536, 64
    %v539 = vpop.permute.xlu0 %538
    %v541 = vmul.f32 %v519, %v539
    %v543 = vrot.slane %v541, 6
    %544 = vrot.lane.b32.xlu0 %v543, 32
    %v545 = vpop.permute.xlu0 %544
    %v546 = vsel %vm119, %v545, 0
    %548 = vmatprep.subr.mxu0 0.0
    %549 = vmatpush1.msra.mxu0 %v28
    %550 = vmatprep.subr.mxu0 0.0
    %551 = vmatpush1.msra.mxu0 %v29
    %552 = vmatprep.subr.mxu0 0.0
    %553 = vmatpush1.msra.mxu0 %v30
    %554 = vmatprep.subr.mxu0 0.0
    %555 = vmatpush1.msra.mxu0 %v31
    %556 = vmatprep.subr.mxu0 0.0
    %557 = vmatpush1.msra.mxu0 0.0
    %558 = vmatprep.subr.mxu0 0.0
    %559 = vmatpush1.msra.mxu0 0.0
    %560 = vmatprep.subr.mxu0 0.0
    %561 = vmatpush1.msra.mxu0 0.0
    %562 = vmatprep.subr.mxu0 0.0
    %563 = vmatpush1.msra.mxu0 0.0
    %564 = vmatprep.subr.mxu0 0.0
    %565 = vmatpush1.msra.mxu0 0.0
    %566 = vmatprep.subr.mxu0 0.0
    %567 = vmatpush1.msra.mxu0 0.0
    %568 = vmatprep.subr.mxu0 0.0
    %569 = vmatpush1.msra.mxu0 0.0
    %570 = vmatprep.subr.mxu0 0.0
    %571 = vmatpush1.msra.mxu0 0.0
    %572 = vmatprep.subr.mxu0 0.0
    %573 = vmatpush1.msra.mxu0 0.0
    %574 = vmatprep.subr.mxu0 0.0
    %575 = vmatpush1.msra.mxu0 0.0
    %576 = vmatprep.subr.mxu0 0.0
    %577 = vmatpush1.msra.mxu0 0.0
    %578 = vmatprep.subr.mxu0 0.0
    %579 = vmatpush1.msra.mxu0 0.0
    %580 = vmatprep.subr.mxu0 0.0
    %581 = vmatpush1.msra.mxu0 0.0
    %582 = vmatprep.subr.mxu0 0.0
    %583 = vmatpush1.msra.mxu0 0.0
    %584 = vmatprep.subr.mxu0 0.0
    %585 = vmatpush1.msra.mxu0 0.0
    %586 = vmatprep.subr.mxu0 0.0
    %587 = vmatpush1.msra.mxu0 0.0
    %588 = vmatprep.subr.mxu0 0.0
    %589 = vmatpush1.msra.mxu0 0.0
    %590 = vmatprep.subr.mxu0 0.0
    %591 = vmatpush1.msra.mxu0 0.0
    %592 = vmatprep.subr.mxu0 0.0
    %593 = vmatpush1.msra.mxu0 0.0
    %594 = vmatprep.subr.mxu0 0.0
    %595 = vmatpush1.msra.mxu0 0.0
    %596 = vmatprep.subr.mxu0 0.0
    %597 = vmatpush1.msra.mxu0 0.0
    %598 = vmatprep.subr.mxu0 0.0
    %599 = vmatpush1.msra.mxu0 0.0
    %600 = vmatprep.subr.mxu0 0.0
    %601 = vmatpush1.msra.mxu0 0.0
    %602 = vmatprep.subr.mxu0 0.0
    %603 = vmatpush1.msra.mxu0 0.0
    %604 = vmatprep.subr.mxu0 0.0
    %605 = vmatpush1.msra.mxu0 0.0
    %606 = vmatprep.subr.mxu0 0.0
    %607 = vmatpush1.msra.mxu0 0.0
    %608 = vmatprep.subr.mxu0 0.0
    %609 = vmatpush1.msra.mxu0 0.0
    %610 = vmatprep.subr.mxu0 0.0
    %611 = vmatpush1.msra.mxu0 0.0
    %612 = vmatprep.mubr.f32.mxu0 0.0
    %613 = vmatmul.mubr.f32.gmra.mrb[0].mxu0 %v546
    %v614 = vpop.f32.mrb[0].mxu0
    %v615 = vadd.f32 0.0, %v614
    %v616 = vpop.f32.mrb[0].mxu0
    %617 = vdwg.mxu0
    %v618 = vadd.f32 %v116, %v615
    %v619 = vxor.u32 %v618, 2147483648
    %v620 = vmul.f32 %v619, 1.442695
    %v621 = vpow.pop %v620
    %v622 = vadd.f32 %v621, 1.0
    %v623 = vrcp.pop %v622
    %v624 = vmul.f32 1.0, %v623
    %v625 = vmul.f32 %v624, 2.0
    %v626 = vsub.f32 %v625, 1.0
    %v628 = vrot.slane %v535, 6
    %v630 = vmul.f32 %v624, %v628
    %632 = vrot.lane.b32.xlu0 %v626, 64
    %v633 = vpop.permute.xlu0 %632
    %v635 = vmul.f32 %v624, %v633
    %637 = vrot.lane.b32.xlu0 %v635, 32
    %v638 = vpop.permute.xlu0 %637
    %v640 = vadd.f32 %v630, %v638
    %v641 = vtanh.pop %v640
    %643 = vrot.lane.b32.xlu0 %v641, 64
    %v644 = vpop.permute.xlu0 %643
    %v646 = vmul.f32 %v624, %v644
    %648 = vrot.lane.b32.xlu0 %v646, 32
    %v649 = vpop.permute.xlu0 %648
    %v650 = vsel %vm119, %v649, 0
    %652 = vmatprep.subr.mxu0 0.0
    %653 = vmatpush1.msra.mxu0 %v28
    %654 = vmatprep.subr.mxu0 0.0
    %655 = vmatpush1.msra.mxu0 %v29
    %656 = vmatprep.subr.mxu0 0.0
    %657 = vmatpush1.msra.mxu0 %v30
    %658 = vmatprep.subr.mxu0 0.0
    %659 = vmatpush1.msra.mxu0 %v31
    %660 = vmatprep.subr.mxu0 0.0
    %661 = vmatpush1.msra.mxu0 0.0
    %662 = vmatprep.subr.mxu0 0.0
    %663 = vmatpush1.msra.mxu0 0.0
    %664 = vmatprep.subr.mxu0 0.0
    %665 = vmatpush1.msra.mxu0 0.0
    %666 = vmatprep.subr.mxu0 0.0
    %667 = vmatpush1.msra.mxu0 0.0
    %668 = vmatprep.subr.mxu0 0.0
    %669 = vmatpush1.msra.mxu0 0.0
    %670 = vmatprep.subr.mxu0 0.0
    %671 = vmatpush1.msra.mxu0 0.0
    %672 = vmatprep.subr.mxu0 0.0
    %673 = vmatpush1.msra.mxu0 0.0
    %674 = vmatprep.subr.mxu0 0.0
    %675 = vmatpush1.msra.mxu0 0.0
    %676 = vmatprep.subr.mxu0 0.0
    %677 = vmatpush1.msra.mxu0 0.0
    %678 = vmatprep.subr.mxu0 0.0
    %679 = vmatpush1.msra.mxu0 0.0
    %680 = vmatprep.subr.mxu0 0.0
    %681 = vmatpush1.msra.mxu0 0.0
    %682 = vmatprep.subr.mxu0 0.0
    %683 = vmatpush1.msra.mxu0 0.0
    %684 = vmatprep.subr.mxu0 0.0
    %685 = vmatpush1.msra.mxu0 0.0
    %686 = vmatprep.subr.mxu0 0.0
    %687 = vmatpush1.msra.mxu0 0.0
    %688 = vmatprep.subr.mxu0 0.0
    %689 = vmatpush1.msra.mxu0 0.0
    %690 = vmatprep.subr.mxu0 0.0
    %691 = vmatpush1.msra.mxu0 0.0
    %692 = vmatprep.subr.mxu0 0.0
    %693 = vmatpush1.msra.mxu0 0.0
    %694 = vmatprep.subr.mxu0 0.0
    %695 = vmatpush1.msra.mxu0 0.0
    %696 = vmatprep.subr.mxu0 0.0
    %697 = vmatpush1.msra.mxu0 0.0
    %698 = vmatprep.subr.mxu0 0.0
    %699 = vmatpush1.msra.mxu0 0.0
    %700 = vmatprep.subr.mxu0 0.0
    %701 = vmatpush1.msra.mxu0 0.0
    %702 = vmatprep.subr.mxu0 0.0
    %703 = vmatpush1.msra.mxu0 0.0
    %704 = vmatprep.subr.mxu0 0.0
    %705 = vmatpush1.msra.mxu0 0.0
    %706 = vmatprep.subr.mxu0 0.0
    %707 = vmatpush1.msra.mxu0 0.0
    %708 = vmatprep.subr.mxu0 0.0
    %709 = vmatpush1.msra.mxu0 0.0
    %710 = vmatprep.subr.mxu0 0.0
    %711 = vmatpush1.msra.mxu0 0.0
    %712 = vmatprep.subr.mxu0 0.0
    %713 = vmatpush1.msra.mxu0 0.0
    %714 = vmatprep.subr.mxu0 0.0
    %715 = vmatpush1.msra.mxu0 0.0
    %716 = vmatprep.mubr.f32.mxu0 0.0
    %717 = vmatmul.mubr.f32.gmra.mrb[0].mxu0 %v650
    %v718 = vpop.f32.mrb[0].mxu0
    %v719 = vadd.f32 0.0, %v718
    %v720 = vpop.f32.mrb[0].mxu0
    %721 = vdwg.mxu0
    %v723 = vrot.slane %v719, 6
    %v725 = vadd.f32 %v116, %v723
    %v726 = vxor.u32 %v725, 2147483648
    %v727 = vmul.f32 %v726, 1.442695
    %v728 = vpow.pop %v727
    %v729 = vadd.f32 %v728, 1.0
    %v730 = vrcp.pop %v729
    %v731 = vmul.f32 1.0, %v730
    %v732 = vmul.f32 %v731, 2.0
    %v733 = vsub.f32 %v732, 1.0
    %v735 = vrot.slane %v640, 6
    %v737 = vmul.f32 %v731, %v735
    %739 = vrot.lane.b32.xlu0 %v733, 64
    %v740 = vpop.permute.xlu0 %739
    %v742 = vmul.f32 %v731, %v740
    %744 = vrot.lane.b32.xlu0 %v742, 32
    %v745 = vpop.permute.xlu0 %744
    %v747 = vadd.f32 %v737, %v745
    %v748 = vtanh.pop %v747
    %750 = vrot.lane.b32.xlu0 %v748, 64
    %v751 = vpop.permute.xlu0 %750
    %v753 = vmul.f32 %v731, %v751
    %v755 = vrot.slane %v753, 2
    %756 = vrot.lane.b32.xlu0 %v755, 32
    %v757 = vpop.permute.xlu0 %756
    %v758 = vsel %vm119, %v757, 0
    %760 = vmatprep.subr.mxu0 0.0
    %761 = vmatpush1.msra.mxu0 %v28
    %762 = vmatprep.subr.mxu0 0.0
    %763 = vmatpush1.msra.mxu0 %v29
    %764 = vmatprep.subr.mxu0 0.0
    %765 = vmatpush1.msra.mxu0 %v30
    %766 = vmatprep.subr.mxu0 0.0
    %767 = vmatpush1.msra.mxu0 %v31
    %768 = vmatprep.subr.mxu0 0.0
    %769 = vmatpush1.msra.mxu0 0.0
    %770 = vmatprep.subr.mxu0 0.0
    %771 = vmatpush1.msra.mxu0 0.0
    %772 = vmatprep.subr.mxu0 0.0
    %773 = vmatpush1.msra.mxu0 0.0
    %774 = vmatprep.subr.mxu0 0.0
    %775 = vmatpush1.msra.mxu0 0.0
    %776 = vmatprep.subr.mxu0 0.0
    %777 = vmatpush1.msra.mxu0 0.0
    %778 = vmatprep.subr.mxu0 0.0
    %779 = vmatpush1.msra.mxu0 0.0
    %780 = vmatprep.subr.mxu0 0.0
    %781 = vmatpush1.msra.mxu0 0.0
    %782 = vmatprep.subr.mxu0 0.0
    %783 = vmatpush1.msra.mxu0 0.0
    %784 = vmatprep.subr.mxu0 0.0
    %785 = vmatpush1.msra.mxu0 0.0
    %786 = vmatprep.subr.mxu0 0.0
    %787 = vmatpush1.msra.mxu0 0.0
    %788 = vmatprep.subr.mxu0 0.0
    %789 = vmatpush1.msra.mxu0 0.0
    %790 = vmatprep.subr.mxu0 0.0
    %791 = vmatpush1.msra.mxu0 0.0
    %792 = vmatprep.subr.mxu0 0.0
    %793 = vmatpush1.msra.mxu0 0.0
    %794 = vmatprep.subr.mxu0 0.0
    %795 = vmatpush1.msra.mxu0 0.0
    %796 = vmatprep.subr.mxu0 0.0
    %797 = vmatpush1.msra.mxu0 0.0
    %798 = vmatprep.subr.mxu0 0.0
    %799 = vmatpush1.msra.mxu0 0.0
    %800 = vmatprep.subr.mxu0 0.0
    %801 = vmatpush1.msra.mxu0 0.0
    %802 = vmatprep.subr.mxu0 0.0
    %803 = vmatpush1.msra.mxu0 0.0
    %804 = vmatprep.subr.mxu0 0.0
    %805 = vmatpush1.msra.mxu0 0.0
    %806 = vmatprep.subr.mxu0 0.0
    %807 = vmatpush1.msra.mxu0 0.0
    %808 = vmatprep.subr.mxu0 0.0
    %809 = vmatpush1.msra.mxu0 0.0
    %810 = vmatprep.subr.mxu0 0.0
    %811 = vmatpush1.msra.mxu0 0.0
    %812 = vmatprep.subr.mxu0 0.0
    %813 = vmatpush1.msra.mxu0 0.0
    %814 = vmatprep.subr.mxu0 0.0
    %815 = vmatpush1.msra.mxu0 0.0
    %816 = vmatprep.subr.mxu0 0.0
    %817 = vmatpush1.msra.mxu0 0.0
    %818 = vmatprep.subr.mxu0 0.0
    %819 = vmatpush1.msra.mxu0 0.0
    %820 = vmatprep.subr.mxu0 0.0
    %821 = vmatpush1.msra.mxu0 0.0
    %822 = vmatprep.subr.mxu0 0.0
    %823 = vmatpush1.msra.mxu0 0.0
    %824 = vmatprep.mubr.f32.mxu0 0.0
    %825 = vmatmul.mubr.f32.gmra.mrb[0].mxu0 %v758
    %v826 = vpop.f32.mrb[0].mxu0
    %v827 = vadd.f32 0.0, %v826
    %v828 = vpop.f32.mrb[0].mxu0
    %829 = vdwg.mxu0
    %v831 = vrot.slane %v827, 4
    %v833 = vadd.f32 %v116, %v831
    %v834 = vxor.u32 %v833, 2147483648
    %v835 = vmul.f32 %v834, 1.442695
    %v836 = vpow.pop %v835
    %v837 = vadd.f32 %v836, 1.0
    %v838 = vrcp.pop %v837
    %v839 = vmul.f32 1.0, %v838
    %v840 = vmul.f32 %v839, 2.0
    %v841 = vsub.f32 %v840, 1.0
    %v843 = vrot.slane %v747, 6
    %v845 = vmul.f32 %v839, %v843
    %847 = vrot.lane.b32.xlu0 %v841, 64
    %v848 = vpop.permute.xlu0 %847
    %v850 = vmul.f32 %v839, %v848
    %852 = vrot.lane.b32.xlu0 %v850, 32
    %v853 = vpop.permute.xlu0 %852
    %v855 = vadd.f32 %v845, %v853
    %v856 = vtanh.pop %v855
    %858 = vrot.lane.b32.xlu0 %v856, 64
    %v859 = vpop.permute.xlu0 %858
    %v861 = vmul.f32 %v839, %v859
    %v863 = vrot.slane %v861, 4
    %864 = vrot.lane.b32.xlu0 %v863, 32
    %v865 = vpop.permute.xlu0 %864
    %v866 = vsel %vm119, %v865, 0
    %868 = vmatprep.subr.mxu0 0.0
    %869 = vmatpush1.msra.mxu0 %v28
    %870 = vmatprep.subr.mxu0 0.0
    %871 = vmatpush1.msra.mxu0 %v29
    %872 = vmatprep.subr.mxu0 0.0
    %873 = vmatpush1.msra.mxu0 %v30
    %874 = vmatprep.subr.mxu0 0.0
    %875 = vmatpush1.msra.mxu0 %v31
    %876 = vmatprep.subr.mxu0 0.0
    %877 = vmatpush1.msra.mxu0 0.0
    %878 = vmatprep.subr.mxu0 0.0
    %879 = vmatpush1.msra.mxu0 0.0
    %880 = vmatprep.subr.mxu0 0.0
    %881 = vmatpush1.msra.mxu0 0.0
    %882 = vmatprep.subr.mxu0 0.0
    %883 = vmatpush1.msra.mxu0 0.0
    %884 = vmatprep.subr.mxu0 0.0
    %885 = vmatpush1.msra.mxu0 0.0
    %886 = vmatprep.subr.mxu0 0.0
    %887 = vmatpush1.msra.mxu0 0.0
    %888 = vmatprep.subr.mxu0 0.0
    %889 = vmatpush1.msra.mxu0 0.0
    %890 = vmatprep.subr.mxu0 0.0
    %891 = vmatpush1.msra.mxu0 0.0
    %892 = vmatprep.subr.mxu0 0.0
    %893 = vmatpush1.msra.mxu0 0.0
    %894 = vmatprep.subr.mxu0 0.0
    %895 = vmatpush1.msra.mxu0 0.0
    %896 = vmatprep.subr.mxu0 0.0
    %897 = vmatpush1.msra.mxu0 0.0
    %898 = vmatprep.subr.mxu0 0.0
    %899 = vmatpush1.msra.mxu0 0.0
    %900 = vmatprep.subr.mxu0 0.0
    %901 = vmatpush1.msra.mxu0 0.0
    %902 = vmatprep.subr.mxu0 0.0
    %903 = vmatpush1.msra.mxu0 0.0
    %904 = vmatprep.subr.mxu0 0.0
    %905 = vmatpush1.msra.mxu0 0.0
    %906 = vmatprep.subr.mxu0 0.0
    %907 = vmatpush1.msra.mxu0 0.0
    %908 = vmatprep.subr.mxu0 0.0
    %909 = vmatpush1.msra.mxu0 0.0
    %910 = vmatprep.subr.mxu0 0.0
    %911 = vmatpush1.msra.mxu0 0.0
    %912 = vmatprep.subr.mxu0 0.0
    %913 = vmatpush1.msra.mxu0 0.0
    %914 = vmatprep.subr.mxu0 0.0
    %915 = vmatpush1.msra.mxu0 0.0
    %916 = vmatprep.subr.mxu0 0.0
    %917 = vmatpush1.msra.mxu0 0.0
    %918 = vmatprep.subr.mxu0 0.0
    %919 = vmatpush1.msra.mxu0 0.0
    %920 = vmatprep.subr.mxu0 0.0
    %921 = vmatpush1.msra.mxu0 0.0
    %922 = vmatprep.subr.mxu0 0.0
    %923 = vmatpush1.msra.mxu0 0.0
    %924 = vmatprep.subr.mxu0 0.0
    %925 = vmatpush1.msra.mxu0 0.0
    %926 = vmatprep.subr.mxu0 0.0
    %927 = vmatpush1.msra.mxu0 0.0
    %928 = vmatprep.subr.mxu0 0.0
    %929 = vmatpush1.msra.mxu0 0.0
    %930 = vmatprep.subr.mxu0 0.0
    %931 = vmatpush1.msra.mxu0 0.0
    %932 = vmatprep.mubr.f32.mxu0 0.0
    %933 = vmatmul.mubr.f32.gmra.mrb[0].mxu0 %v866
    %v934 = vpop.f32.mrb[0].mxu0
    %v935 = vadd.f32 0.0, %v934
    %v936 = vpop.f32.mrb[0].mxu0
    %937 = vdwg.mxu0
    %v939 = vrot.slane %v935, 2
    %v941 = vadd.f32 %v116, %v939
    %v942 = vxor.u32 %v941, 2147483648
    %v943 = vmul.f32 %v942, 1.442695
    %v944 = vpow.pop %v943
    %v945 = vadd.f32 %v944, 1.0
    %v946 = vrcp.pop %v945
    %v947 = vmul.f32 1.0, %v946
    %v948 = vmul.f32 %v947, 2.0
    %v949 = vsub.f32 %v948, 1.0
    %v951 = vrot.slane %v855, 6
    %v953 = vmul.f32 %v947, %v951
    %955 = vrot.lane.b32.xlu0 %v949, 64
    %v956 = vpop.permute.xlu0 %955
    %v958 = vmul.f32 %v947, %v956
    %960 = vrot.lane.b32.xlu0 %v958, 32
    %v961 = vpop.permute.xlu0 %960
    %v963 = vadd.f32 %v953, %v961
    %v964 = vtanh.pop %v963
    %966 = vrot.lane.b32.xlu0 %v964, 64
    %v967 = vpop.permute.xlu0 %966
    %v969 = vmul.f32 %v947, %v967
    %vm970 = vcmask 1041408
    %v971 = vsel %vm970, %v218, %v325
    %vm972 = vcmask 1043456
    %v973 = vsel %vm972, %v971, %v433
    %vm974 = vcmask 1045504
    %v975 = vsel %vm974, %v973, %v541
    %v976 = vsel %vm970, %v646, %v753
    %v977 = vsel %vm972, %v976, %v861
    %v978 = vsel %vm974, %v977, %v969
    %v979 = vld [vmem:[#allocation2 + $0x30] sm:$0xff]
    %v980 = vld [vmem:[#allocation2 + $0x38] sm:$0xff]
    %v981 = vld [vmem:[#allocation2 + $0x40] sm:$0xff]
    %v982 = vld [vmem:[#allocation2 + $0x48] sm:$0xff]
    %v983 = vld [vmem:[#allocation2 + $0x50] sm:$0xff]
    %v984 = vld [vmem:[#allocation2 + $0x58] sm:$0xff]
    %v985 = vld [vmem:[#allocation2 + $0x60] sm:$0xff]
    %v986 = vld [vmem:[#allocation2 + $0x68] sm:$0xff]
    %v987 = vld [vmem:[#allocation2 + $0x70] sm:$0x1]
    %v988 = vlaneseq
    %v989 = vshrl.u32 %v988, 7
    %v990 = vsub.s32 0, %v989
    %v991 = vrot.slane %v987, %v990
    %994 = vrot.lane.b32.xlu0 %v975, 32
    %v995 = vpop.permute.xlu0 %994
    %996 = vrot.lane.b32.xlu0 %v978, 32
    %v997 = vpop.permute.xlu0 %996
    %v998 = vsel %vm119, %v995, 0
    %v1000 = vsel %vm119, %v997, 0
    %1002 = vmatprep.subr.mxu0 0.0
    %1003 = vmatpush1.msra.mxu0 %v979
    %1004 = vmatprep.subr.mxu0 0.0
    %1005 = vmatpush1.msra.mxu0 %v980
    %1006 = vmatprep.subr.mxu0 0.0
    %1007 = vmatpush1.msra.mxu0 %v981
    %1008 = vmatprep.subr.mxu0 0.0
    %1009 = vmatpush1.msra.mxu0 %v982
    %1010 = vmatprep.subr.mxu0 0.0
    %1011 = vmatpush1.msra.mxu0 0.0
    %1012 = vmatprep.subr.mxu0 0.0
    %1013 = vmatpush1.msra.mxu0 0.0
    %1014 = vmatprep.subr.mxu0 0.0
    %1015 = vmatpush1.msra.mxu0 0.0
    %1016 = vmatprep.subr.mxu0 0.0
    %1017 = vmatpush1.msra.mxu0 0.0
    %1018 = vmatprep.subr.mxu0 0.0
    %1019 = vmatpush1.msra.mxu0 0.0
    %1020 = vmatprep.subr.mxu0 0.0
    %1021 = vmatpush1.msra.mxu0 0.0
    %1022 = vmatprep.subr.mxu0 0.0
    %1023 = vmatpush1.msra.mxu0 0.0
    %1024 = vmatprep.subr.mxu0 0.0
    %1025 = vmatpush1.msra.mxu0 0.0
    %1026 = vmatprep.subr.mxu0 0.0
    %1027 = vmatpush1.msra.mxu0 0.0
    %1028 = vmatprep.subr.mxu0 0.0
    %1029 = vmatpush1.msra.mxu0 0.0
    %1030 = vmatprep.subr.mxu0 0.0
    %1031 = vmatpush1.msra.mxu0 0.0
    %1032 = vmatprep.subr.mxu0 0.0
    %1033 = vmatpush1.msra.mxu0 0.0
    %1034 = vmatprep.subr.mxu0 0.0
    %1035 = vmatpush1.msra.mxu0 0.0
    %1036 = vmatprep.subr.mxu0 0.0
    %1037 = vmatpush1.msra.mxu0 0.0
    %1038 = vmatprep.subr.mxu0 0.0
    %1039 = vmatpush1.msra.mxu0 0.0
    %1040 = vmatprep.subr.mxu0 0.0
    %1041 = vmatpush1.msra.mxu0 0.0
    %1042 = vmatprep.subr.mxu0 0.0
    %1043 = vmatpush1.msra.mxu0 0.0
    %1044 = vmatprep.subr.mxu0 0.0
    %1045 = vmatpush1.msra.mxu0 0.0
    %1046 = vmatprep.subr.mxu0 0.0
    %1047 = vmatpush1.msra.mxu0 0.0
    %1048 = vmatprep.subr.mxu0 0.0
    %1049 = vmatpush1.msra.mxu0 0.0
    %1050 = vmatprep.subr.mxu0 0.0
    %1051 = vmatpush1.msra.mxu0 0.0
    %1052 = vmatprep.subr.mxu0 0.0
    %1053 = vmatpush1.msra.mxu0 0.0
    %1054 = vmatprep.subr.mxu0 0.0
    %1055 = vmatpush1.msra.mxu0 0.0
    %1056 = vmatprep.subr.mxu0 0.0
    %1057 = vmatpush1.msra.mxu0 0.0
    %1058 = vmatprep.subr.mxu0 0.0
    %1059 = vmatpush1.msra.mxu0 0.0
    %1060 = vmatprep.subr.mxu0 0.0
    %1061 = vmatpush1.msra.mxu0 0.0
    %1062 = vmatprep.subr.mxu0 0.0
    %1063 = vmatpush1.msra.mxu0 0.0
    %1064 = vmatprep.subr.mxu0 0.0
    %1065 = vmatpush1.msra.mxu0 0.0
    %1066 = vmatprep.mubr.f32.mxu0 0.0
    %1067 = vmatmul.mubr.f32.gmra.mrb[0].mxu0 %v998
    %v1068 = vpop.f32.mrb[0].mxu0
    %v1069 = vadd.f32 %v991, %v1068
    %v1070 = vpop.f32.mrb[0].mxu0
    %1071 = vmatprep.mubr.f32.mxu0 0.0
    %1072 = vmatmul.mubr.f32.gmra.mrb[0].mxu0 %v1000
    %v1073 = vpop.f32.mrb[0].mxu0
    %v1074 = vadd.f32 %v991, %v1073
    %v1075 = vpop.f32.mrb[0].mxu0
    %1076 = vdwg.mxu0
    %1077 = vmatprep.subr.mxu0 0.0
    %1078 = vmatpush1.msra.mxu0 %v983
    %1079 = vmatprep.subr.mxu0 0.0
    %1080 = vmatpush1.msra.mxu0 %v984
    %1081 = vmatprep.subr.mxu0 0.0
    %1082 = vmatpush1.msra.mxu0 %v985
    %1083 = vmatprep.subr.mxu0 0.0
    %1084 = vmatpush1.msra.mxu0 %v986
    %1085 = vmatprep.subr.mxu0 0.0
    %1086 = vmatpush1.msra.mxu0 0.0
    %1087 = vmatprep.subr.mxu0 0.0
    %1088 = vmatpush1.msra.mxu0 0.0
    %1089 = vmatprep.subr.mxu0 0.0
    %1090 = vmatpush1.msra.mxu0 0.0
    %1091 = vmatprep.subr.mxu0 0.0
    %1092 = vmatpush1.msra.mxu0 0.0
    %1093 = vmatprep.subr.mxu0 0.0
    %1094 = vmatpush1.msra.mxu0 0.0
    %1095 = vmatprep.subr.mxu0 0.0
    %1096 = vmatpush1.msra.mxu0 0.0
    %1097 = vmatprep.subr.mxu0 0.0
    %1098 = vmatpush1.msra.mxu0 0.0
    %1099 = vmatprep.subr.mxu0 0.0
    %1100 = vmatpush1.msra.mxu0 0.0
    %1101 = vmatprep.subr.mxu0 0.0
    %1102 = vmatpush1.msra.mxu0 0.0
    %1103 = vmatprep.subr.mxu0 0.0
    %1104 = vmatpush1.msra.mxu0 0.0
    %1105 = vmatprep.subr.mxu0 0.0
    %1106 = vmatpush1.msra.mxu0 0.0
    %1107 = vmatprep.subr.mxu0 0.0
    %1108 = vmatpush1.msra.mxu0 0.0
    %1109 = vmatprep.subr.mxu0 0.0
    %1110 = vmatpush1.msra.mxu0 0.0
    %1111 = vmatprep.subr.mxu0 0.0
    %1112 = vmatpush1.msra.mxu0 0.0
    %1113 = vmatprep.subr.mxu0 0.0
    %1114 = vmatpush1.msra.mxu0 0.0
    %1115 = vmatprep.subr.mxu0 0.0
    %1116 = vmatpush1.msra.mxu0 0.0
    %1117 = vmatprep.subr.mxu0 0.0
    %1118 = vmatpush1.msra.mxu0 0.0
    %1119 = vmatprep.subr.mxu0 0.0
    %1120 = vmatpush1.msra.mxu0 0.0
    %1121 = vmatprep.subr.mxu0 0.0
    %1122 = vmatpush1.msra.mxu0 0.0
    %1123 = vmatprep.subr.mxu0 0.0
    %1124 = vmatpush1.msra.mxu0 0.0
    %1125 = vmatprep.subr.mxu0 0.0
    %1126 = vmatpush1.msra.mxu0 0.0
    %1127 = vmatprep.subr.mxu0 0.0
    %1128 = vmatpush1.msra.mxu0 0.0
    %1129 = vmatprep.subr.mxu0 0.0
    %1130 = vmatpush1.msra.mxu0 0.0
    %1131 = vmatprep.subr.mxu0 0.0
    %1132 = vmatpush1.msra.mxu0 0.0
    %1133 = vmatprep.subr.mxu0 0.0
    %1134 = vmatpush1.msra.mxu0 0.0
    %1135 = vmatprep.subr.mxu0 0.0
    %1136 = vmatpush1.msra.mxu0 0.0
    %1137 = vmatprep.subr.mxu0 0.0
    %1138 = vmatpush1.msra.mxu0 0.0
    %1139 = vmatprep.subr.mxu0 0.0
    %1140 = vmatpush1.msra.mxu0 0.0
    %1141 = vmatprep.mubr.f32.mxu0 0.0
    %1142 = vmatmul.mubr.f32.gmra.mrb[0].mxu0 %v121
    %v1143 = vpop.f32.mrb[0].mxu0
    %v1144 = vadd.f32 0.0, %v1143
    %v1145 = vpop.f32.mrb[0].mxu0
    %1146 = vdwg.mxu0
    %v1147 = vadd.f32 %v1069, %v1144
    %v1148 = vxor.u32 %v1147, 2147483648
    %v1149 = vmul.f32 %v1148, 1.442695
    %v1150 = vpow.pop %v1149
    %v1151 = vadd.f32 %v1150, 1.0
    %v1152 = vrcp.pop %v1151
    %v1153 = vmul.f32 1.0, %v1152
    %v1154 = vmul.f32 %v1153, 2.0
    %v1155 = vsub.f32 %v1154, 1.0
    %v1156 = vmul.f32 %v1153, 0.0
    %1158 = vrot.lane.b32.xlu0 %v1155, 64
    %v1159 = vpop.permute.xlu0 %1158
    %v1161 = vmul.f32 %v1153, %v1159
    %1163 = vrot.lane.b32.xlu0 %v1161, 32
    %v1164 = vpop.permute.xlu0 %1163
    %v1166 = vadd.f32 %v1156, %v1164
    %v1167 = vtanh.pop %v1166
    %1169 = vrot.lane.b32.xlu0 %v1167, 64
    %v1170 = vpop.permute.xlu0 %1169
    %v1172 = vmul.f32 %v1153, %v1170
    %1174 = vrot.lane.b32.xlu0 %v1172, 32
    %v1175 = vpop.permute.xlu0 %1174
    %v1176 = vsel %vm119, %v1175, 0
    %1178 = vmatprep.subr.mxu0 0.0
    %1179 = vmatpush1.msra.mxu0 %v983
    %1180 = vmatprep.subr.mxu0 0.0
    %1181 = vmatpush1.msra.mxu0 %v984
    %1182 = vmatprep.subr.mxu0 0.0
    %1183 = vmatpush1.msra.mxu0 %v985
    %1184 = vmatprep.subr.mxu0 0.0
    %1185 = vmatpush1.msra.mxu0 %v986
    %1186 = vmatprep.subr.mxu0 0.0
    %1187 = vmatpush1.msra.mxu0 0.0
    %1188 = vmatprep.subr.mxu0 0.0
    %1189 = vmatpush1.msra.mxu0 0.0
    %1190 = vmatprep.subr.mxu0 0.0
    %1191 = vmatpush1.msra.mxu0 0.0
    %1192 = vmatprep.subr.mxu0 0.0
    %1193 = vmatpush1.msra.mxu0 0.0
    %1194 = vmatprep.subr.mxu0 0.0
    %1195 = vmatpush1.msra.mxu0 0.0
    %1196 = vmatprep.subr.mxu0 0.0
    %1197 = vmatpush1.msra.mxu0 0.0
    %1198 = vmatprep.subr.mxu0 0.0
    %1199 = vmatpush1.msra.mxu0 0.0
    %1200 = vmatprep.subr.mxu0 0.0
    %1201 = vmatpush1.msra.mxu0 0.0
    %1202 = vmatprep.subr.mxu0 0.0
    %1203 = vmatpush1.msra.mxu0 0.0
    %1204 = vmatprep.subr.mxu0 0.0
    %1205 = vmatpush1.msra.mxu0 0.0
    %1206 = vmatprep.subr.mxu0 0.0
    %1207 = vmatpush1.msra.mxu0 0.0
    %1208 = vmatprep.subr.mxu0 0.0
    %1209 = vmatpush1.msra.mxu0 0.0
    %1210 = vmatprep.subr.mxu0 0.0
    %1211 = vmatpush1.msra.mxu0 0.0
    %1212 = vmatprep.subr.mxu0 0.0
    %1213 = vmatpush1.msra.mxu0 0.0
    %1214 = vmatprep.subr.mxu0 0.0
    %1215 = vmatpush1.msra.mxu0 0.0
    %1216 = vmatprep.subr.mxu0 0.0
    %1217 = vmatpush1.msra.mxu0 0.0
    %1218 = vmatprep.subr.mxu0 0.0
    %1219 = vmatpush1.msra.mxu0 0.0
    %1220 = vmatprep.subr.mxu0 0.0
    %1221 = vmatpush1.msra.mxu0 0.0
    %1222 = vmatprep.subr.mxu0 0.0
    %1223 = vmatpush1.msra.mxu0 0.0
    %1224 = vmatprep.subr.mxu0 0.0
    %1225 = vmatpush1.msra.mxu0 0.0
    %1226 = vmatprep.subr.mxu0 0.0
    %1227 = vmatpush1.msra.mxu0 0.0
    %1228 = vmatprep.subr.mxu0 0.0
    %1229 = vmatpush1.msra.mxu0 0.0
    %1230 = vmatprep.subr.mxu0 0.0
    %1231 = vmatpush1.msra.mxu0 0.0
    %1232 = vmatprep.subr.mxu0 0.0
    %1233 = vmatpush1.msra.mxu0 0.0
    %1234 = vmatprep.subr.mxu0 0.0
    %1235 = vmatpush1.msra.mxu0 0.0
    %1236 = vmatprep.subr.mxu0 0.0
    %1237 = vmatpush1.msra.mxu0 0.0
    %1238 = vmatprep.subr.mxu0 0.0
    %1239 = vmatpush1.msra.mxu0 0.0
    %1240 = vmatprep.subr.mxu0 0.0
    %1241 = vmatpush1.msra.mxu0 0.0
    %1242 = vmatprep.mubr.f32.mxu0 0.0
    %1243 = vmatmul.mubr.f32.gmra.mrb[0].mxu0 %v1176
    %v1244 = vpop.f32.mrb[0].mxu0
    %v1245 = vadd.f32 0.0, %v1244
    %v1246 = vpop.f32.mrb[0].mxu0
    %1247 = vdwg.mxu0
    %v1249 = vrot.slane %v1245, 6
    %v1251 = vadd.f32 %v1069, %v1249
    %v1252 = vxor.u32 %v1251, 2147483648
    %v1253 = vmul.f32 %v1252, 1.442695
    %v1254 = vpow.pop %v1253
    %v1255 = vadd.f32 %v1254, 1.0
    %v1256 = vrcp.pop %v1255
    %v1257 = vmul.f32 1.0, %v1256
    %v1258 = vmul.f32 %v1257, 2.0
    %v1259 = vsub.f32 %v1258, 1.0
    %v1261 = vrot.slane %v1166, 6
    %v1263 = vmul.f32 %v1257, %v1261
    %1265 = vrot.lane.b32.xlu0 %v1259, 64
    %v1266 = vpop.permute.xlu0 %1265
    %v1268 = vmul.f32 %v1257, %v1266
    %1270 = vrot.lane.b32.xlu0 %v1268, 32
    %v1271 = vpop.permute.xlu0 %1270
    %v1273 = vadd.f32 %v1263, %v1271
    %v1274 = vtanh.pop %v1273
    %1276 = vrot.lane.b32.xlu0 %v1274, 64
    %v1277 = vpop.permute.xlu0 %1276
    %v1279 = vmul.f32 %v1257, %v1277
    %v1281 = vrot.slane %v1279, 2
    %1282 = vrot.lane.b32.xlu0 %v1281, 32
    %v1283 = vpop.permute.xlu0 %1282
    %v1284 = vsel %vm119, %v1283, 0
    %1286 = vmatprep.subr.mxu0 0.0
    %1287 = vmatpush1.msra.mxu0 %v983
    %1288 = vmatprep.subr.mxu0 0.0
    %1289 = vmatpush1.msra.mxu0 %v984
    %1290 = vmatprep.subr.mxu0 0.0
    %1291 = vmatpush1.msra.mxu0 %v985
    %1292 = vmatprep.subr.mxu0 0.0
    %1293 = vmatpush1.msra.mxu0 %v986
    %1294 = vmatprep.subr.mxu0 0.0
    %1295 = vmatpush1.msra.mxu0 0.0
    %1296 = vmatprep.subr.mxu0 0.0
    %1297 = vmatpush1.msra.mxu0 0.0
    %1298 = vmatprep.subr.mxu0 0.0
    %1299 = vmatpush1.msra.mxu0 0.0
    %1300 = vmatprep.subr.mxu0 0.0
    %1301 = vmatpush1.msra.mxu0 0.0
    %1302 = vmatprep.subr.mxu0 0.0
    %1303 = vmatpush1.msra.mxu0 0.0
    %1304 = vmatprep.subr.mxu0 0.0
    %1305 = vmatpush1.msra.mxu0 0.0
    %1306 = vmatprep.subr.mxu0 0.0
    %1307 = vmatpush1.msra.mxu0 0.0
    %1308 = vmatprep.subr.mxu0 0.0
    %1309 = vmatpush1.msra.mxu0 0.0
    %1310 = vmatprep.subr.mxu0 0.0
    %1311 = vmatpush1.msra.mxu0 0.0
    %1312 = vmatprep.subr.mxu0 0.0
    %1313 = vmatpush1.msra.mxu0 0.0
    %1314 = vmatprep.subr.mxu0 0.0
    %1315 = vmatpush1.msra.mxu0 0.0
    %1316 = vmatprep.subr.mxu0 0.0
    %1317 = vmatpush1.msra.mxu0 0.0
    %1318 = vmatprep.subr.mxu0 0.0
    %1319 = vmatpush1.msra.mxu0 0.0
    %1320 = vmatprep.subr.mxu0 0.0
    %1321 = vmatpush1.msra.mxu0 0.0
    %1322 = vmatprep.subr.mxu0 0.0
    %1323 = vmatpush1.msra.mxu0 0.0
    %1324 = vmatprep.subr.mxu0 0.0
    %1325 = vmatpush1.msra.mxu0 0.0
    %1326 = vmatprep.subr.mxu0 0.0
    %1327 = vmatpush1.msra.mxu0 0.0
    %1328 = vmatprep.subr.mxu0 0.0
    %1329 = vmatpush1.msra.mxu0 0.0
    %1330 = vmatprep.subr.mxu0 0.0
    %1331 = vmatpush1.msra.mxu0 0.0
    %1332 = vmatprep.subr.mxu0 0.0
    %1333 = vmatpush1.msra.mxu0 0.0
    %1334 = vmatprep.subr.mxu0 0.0
    %1335 = vmatpush1.msra.mxu0 0.0
    %1336 = vmatprep.subr.mxu0 0.0
    %1337 = vmatpush1.msra.mxu0 0.0
    %1338 = vmatprep.subr.mxu0 0.0
    %1339 = vmatpush1.msra.mxu0 0.0
    %1340 = vmatprep.subr.mxu0 0.0
    %1341 = vmatpush1.msra.mxu0 0.0
    %1342 = vmatprep.subr.mxu0 0.0
    %1343 = vmatpush1.msra.mxu0 0.0
    %1344 = vmatprep.subr.mxu0 0.0
    %1345 = vmatpush1.msra.mxu0 0.0
    %1346 = vmatprep.subr.mxu0 0.0
    %1347 = vmatpush1.msra.mxu0 0.0
    %1348 = vmatprep.subr.mxu0 0.0
    %1349 = vmatpush1.msra.mxu0 0.0
    %1350 = vmatprep.mubr.f32.mxu0 0.0
    %1351 = vmatmul.mubr.f32.gmra.mrb[0].mxu0 %v1284
    %v1352 = vpop.f32.mrb[0].mxu0
    %v1353 = vadd.f32 0.0, %v1352
    %v1354 = vpop.f32.mrb[0].mxu0
    %1355 = vdwg.mxu0
    %v1357 = vrot.slane %v1353, 4
    %v1359 = vadd.f32 %v1069, %v1357
    %v1360 = vxor.u32 %v1359, 2147483648
    %v1361 = vmul.f32 %v1360, 1.442695
    %v1362 = vpow.pop %v1361
    %v1363 = vadd.f32 %v1362, 1.0
    %v1364 = vrcp.pop %v1363
    %v1365 = vmul.f32 1.0, %v1364
    %v1366 = vmul.f32 %v1365, 2.0
    %v1367 = vsub.f32 %v1366, 1.0
    %v1369 = vrot.slane %v1273, 6
    %v1371 = vmul.f32 %v1365, %v1369
    %1373 = vrot.lane.b32.xlu0 %v1367, 64
    %v1374 = vpop.permute.xlu0 %1373
    %v1376 = vmul.f32 %v1365, %v1374
    %1378 = vrot.lane.b32.xlu0 %v1376, 32
    %v1379 = vpop.permute.xlu0 %1378
    %v1381 = vadd.f32 %v1371, %v1379
    %v1382 = vtanh.pop %v1381
    %1384 = vrot.lane.b32.xlu0 %v1382, 64
    %v1385 = vpop.permute.xlu0 %1384
    %v1387 = vmul.f32 %v1365, %v1385
    %v1389 = vrot.slane %v1387, 4
    %1390 = vrot.lane.b32.xlu0 %v1389, 32
    %v1391 = vpop.permute.xlu0 %1390
    %v1392 = vsel %vm119, %v1391, 0
    %1394 = vmatprep.subr.mxu0 0.0
    %1395 = vmatpush1.msra.mxu0 %v983
    %1396 = vmatprep.subr.mxu0 0.0
    %1397 = vmatpush1.msra.mxu0 %v984
    %1398 = vmatprep.subr.mxu0 0.0
    %1399 = vmatpush1.msra.mxu0 %v985
    %1400 = vmatprep.subr.mxu0 0.0
    %1401 = vmatpush1.msra.mxu0 %v986
    %1402 = vmatprep.subr.mxu0 0.0
    %1403 = vmatpush1.msra.mxu0 0.0
    %1404 = vmatprep.subr.mxu0 0.0
    %1405 = vmatpush1.msra.mxu0 0.0
    %1406 = vmatprep.subr.mxu0 0.0
    %1407 = vmatpush1.msra.mxu0 0.0
    %1408 = vmatprep.subr.mxu0 0.0
    %1409 = vmatpush1.msra.mxu0 0.0
    %1410 = vmatprep.subr.mxu0 0.0
    %1411 = vmatpush1.msra.mxu0 0.0
    %1412 = vmatprep.subr.mxu0 0.0
    %1413 = vmatpush1.msra.mxu0 0.0
    %1414 = vmatprep.subr.mxu0 0.0
    %1415 = vmatpush1.msra.mxu0 0.0
    %1416 = vmatprep.subr.mxu0 0.0
    %1417 = vmatpush1.msra.mxu0 0.0
    %1418 = vmatprep.subr.mxu0 0.0
    %1419 = vmatpush1.msra.mxu0 0.0
    %1420 = vmatprep.subr.mxu0 0.0
    %1421 = vmatpush1.msra.mxu0 0.0
    %1422 = vmatprep.subr.mxu0 0.0
    %1423 = vmatpush1.msra.mxu0 0.0
    %1424 = vmatprep.subr.mxu0 0.0
    %1425 = vmatpush1.msra.mxu0 0.0
    %1426 = vmatprep.subr.mxu0 0.0
    %1427 = vmatpush1.msra.mxu0 0.0
    %1428 = vmatprep.subr.mxu0 0.0
    %1429 = vmatpush1.msra.mxu0 0.0
    %1430 = vmatprep.subr.mxu0 0.0
    %1431 = vmatpush1.msra.mxu0 0.0
    %1432 = vmatprep.subr.mxu0 0.0
    %1433 = vmatpush1.msra.mxu0 0.0
    %1434 = vmatprep.subr.mxu0 0.0
    %1435 = vmatpush1.msra.mxu0 0.0
    %1436 = vmatprep.subr.mxu0 0.0
    %1437 = vmatpush1.msra.mxu0 0.0
    %1438 = vmatprep.subr.mxu0 0.0
    %1439 = vmatpush1.msra.mxu0 0.0
    %1440 = vmatprep.subr.mxu0 0.0
    %1441 = vmatpush1.msra.mxu0 0.0
    %1442 = vmatprep.subr.mxu0 0.0
    %1443 = vmatpush1.msra.mxu0 0.0
    %1444 = vmatprep.subr.mxu0 0.0
    %1445 = vmatpush1.msra.mxu0 0.0
    %1446 = vmatprep.subr.mxu0 0.0
    %1447 = vmatpush1.msra.mxu0 0.0
    %1448 = vmatprep.subr.mxu0 0.0
    %1449 = vmatpush1.msra.mxu0 0.0
    %1450 = vmatprep.subr.mxu0 0.0
    %1451 = vmatpush1.msra.mxu0 0.0
    %1452 = vmatprep.subr.mxu0 0.0
    %1453 = vmatpush1.msra.mxu0 0.0
    %1454 = vmatprep.subr.mxu0 0.0
    %1455 = vmatpush1.msra.mxu0 0.0
    %1456 = vmatprep.subr.mxu0 0.0
    %1457 = vmatpush1.msra.mxu0 0.0
    %1458 = vmatprep.mubr.f32.mxu0 0.0
    %1459 = vmatmul.mubr.f32.gmra.mrb[0].mxu0 %v1392
    %v1460 = vpop.f32.mrb[0].mxu0
    %v1461 = vadd.f32 0.0, %v1460
    %v1462 = vpop.f32.mrb[0].mxu0
    %1463 = vdwg.mxu0
    %v1465 = vrot.slane %v1461, 2
    %v1467 = vadd.f32 %v1069, %v1465
    %v1468 = vxor.u32 %v1467, 2147483648
    %v1469 = vmul.f32 %v1468, 1.442695
    %v1470 = vpow.pop %v1469
    %v1471 = vadd.f32 %v1470, 1.0
    %v1472 = vrcp.pop %v1471
    %v1473 = vmul.f32 1.0, %v1472
    %v1474 = vmul.f32 %v1473, 2.0
    %v1475 = vsub.f32 %v1474, 1.0
    %v1477 = vrot.slane %v1381, 6
    %v1479 = vmul.f32 %v1473, %v1477
    %1481 = vrot.lane.b32.xlu0 %v1475, 64
    %v1482 = vpop.permute.xlu0 %1481
    %v1484 = vmul.f32 %v1473, %v1482
    %1486 = vrot.lane.b32.xlu0 %v1484, 32
    %v1487 = vpop.permute.xlu0 %1486
    %v1489 = vadd.f32 %v1479, %v1487
    %v1490 = vtanh.pop %v1489
    %1492 = vrot.lane.b32.xlu0 %v1490, 64
    %v1493 = vpop.permute.xlu0 %1492
    %v1495 = vmul.f32 %v1473, %v1493
    %v1497 = vrot.slane %v1495, 6
    %1498 = vrot.lane.b32.xlu0 %v1497, 32
    %v1499 = vpop.permute.xlu0 %1498
    %v1500 = vsel %vm119, %v1499, 0
    %1502 = vmatprep.subr.mxu0 0.0
    %1503 = vmatpush1.msra.mxu0 %v983
    %1504 = vmatprep.subr.mxu0 0.0
    %1505 = vmatpush1.msra.mxu0 %v984
    %1506 = vmatprep.subr.mxu0 0.0
    %1507 = vmatpush1.msra.mxu0 %v985
    %1508 = vmatprep.subr.mxu0 0.0
    %1509 = vmatpush1.msra.mxu0 %v986
    %1510 = vmatprep.subr.mxu0 0.0
    %1511 = vmatpush1.msra.mxu0 0.0
    %1512 = vmatprep.subr.mxu0 0.0
    %1513 = vmatpush1.msra.mxu0 0.0
    %1514 = vmatprep.subr.mxu0 0.0
    %1515 = vmatpush1.msra.mxu0 0.0
    %1516 = vmatprep.subr.mxu0 0.0
    %1517 = vmatpush1.msra.mxu0 0.0
    %1518 = vmatprep.subr.mxu0 0.0
    %1519 = vmatpush1.msra.mxu0 0.0
    %1520 = vmatprep.subr.mxu0 0.0
    %1521 = vmatpush1.msra.mxu0 0.0
    %1522 = vmatprep.subr.mxu0 0.0
    %1523 = vmatpush1.msra.mxu0 0.0
    %1524 = vmatprep.subr.mxu0 0.0
    %1525 = vmatpush1.msra.mxu0 0.0
    %1526 = vmatprep.subr.mxu0 0.0
    %1527 = vmatpush1.msra.mxu0 0.0
    %1528 = vmatprep.subr.mxu0 0.0
    %1529 = vmatpush1.msra.mxu0 0.0
    %1530 = vmatprep.subr.mxu0 0.0
    %1531 = vmatpush1.msra.mxu0 0.0
    %1532 = vmatprep.subr.mxu0 0.0
    %1533 = vmatpush1.msra.mxu0 0.0
    %1534 = vmatprep.subr.mxu0 0.0
    %1535 = vmatpush1.msra.mxu0 0.0
    %1536 = vmatprep.subr.mxu0 0.0
    %1537 = vmatpush1.msra.mxu0 0.0
    %1538 = vmatprep.subr.mxu0 0.0
    %1539 = vmatpush1.msra.mxu0 0.0
    %1540 = vmatprep.subr.mxu0 0.0
    %1541 = vmatpush1.msra.mxu0 0.0
    %1542 = vmatprep.subr.mxu0 0.0
    %1543 = vmatpush1.msra.mxu0 0.0
    %1544 = vmatprep.subr.mxu0 0.0
    %1545 = vmatpush1.msra.mxu0 0.0
    %1546 = vmatprep.subr.mxu0 0.0
    %1547 = vmatpush1.msra.mxu0 0.0
    %1548 = vmatprep.subr.mxu0 0.0
    %1549 = vmatpush1.msra.mxu0 0.0
    %1550 = vmatprep.subr.mxu0 0.0
    %1551 = vmatpush1.msra.mxu0 0.0
    %1552 = vmatprep.subr.mxu0 0.0
    %1553 = vmatpush1.msra.mxu0 0.0
    %1554 = vmatprep.subr.mxu0 0.0
    %1555 = vmatpush1.msra.mxu0 0.0
    %1556 = vmatprep.subr.mxu0 0.0
    %1557 = vmatpush1.msra.mxu0 0.0
    %1558 = vmatprep.subr.mxu0 0.0
    %1559 = vmatpush1.msra.mxu0 0.0
    %1560 = vmatprep.subr.mxu0 0.0
    %1561 = vmatpush1.msra.mxu0 0.0
    %1562 = vmatprep.subr.mxu0 0.0
    %1563 = vmatpush1.msra.mxu0 0.0
    %1564 = vmatprep.subr.mxu0 0.0
    %1565 = vmatpush1.msra.mxu0 0.0
    %1566 = vmatprep.mubr.f32.mxu0 0.0
    %1567 = vmatmul.mubr.f32.gmra.mrb[0].mxu0 %v1500
    %v1568 = vpop.f32.mrb[0].mxu0
    %v1569 = vadd.f32 0.0, %v1568
    %v1570 = vpop.f32.mrb[0].mxu0
    %1571 = vdwg.mxu0
    %v1572 = vadd.f32 %v1074, %v1569
    %v1573 = vxor.u32 %v1572, 2147483648
    %v1574 = vmul.f32 %v1573, 1.442695
    %v1575 = vpow.pop %v1574
    %v1576 = vadd.f32 %v1575, 1.0
    %v1577 = vrcp.pop %v1576
    %v1578 = vmul.f32 1.0, %v1577
    %v1579 = vmul.f32 %v1578, 2.0
    %v1580 = vsub.f32 %v1579, 1.0
    %v1582 = vrot.slane %v1489, 6
    %v1584 = vmul.f32 %v1578, %v1582
    %1586 = vrot.lane.b32.xlu0 %v1580, 64
    %v1587 = vpop.permute.xlu0 %1586
    %v1589 = vmul.f32 %v1578, %v1587
    %1591 = vrot.lane.b32.xlu0 %v1589, 32
    %v1592 = vpop.permute.xlu0 %1591
    %v1594 = vadd.f32 %v1584, %v1592
    %v1595 = vtanh.pop %v1594
    %1597 = vrot.lane.b32.xlu0 %v1595, 64
    %v1598 = vpop.permute.xlu0 %1597
    %v1600 = vmul.f32 %v1578, %v1598
    %1602 = vrot.lane.b32.xlu0 %v1600, 32
    %v1603 = vpop.permute.xlu0 %1602
    %v1604 = vsel %vm119, %v1603, 0
    %1606 = vmatprep.subr.mxu0 0.0
    %1607 = vmatpush1.msra.mxu0 %v983
    %1608 = vmatprep.subr.mxu0 0.0
    %1609 = vmatpush1.msra.mxu0 %v984
    %1610 = vmatprep.subr.mxu0 0.0
    %1611 = vmatpush1.msra.mxu0 %v985
    %1612 = vmatprep.subr.mxu0 0.0
    %1613 = vmatpush1.msra.mxu0 %v986
    %1614 = vmatprep.subr.mxu0 0.0
    %1615 = vmatpush1.msra.mxu0 0.0
    %1616 = vmatprep.subr.mxu0 0.0
    %1617 = vmatpush1.msra.mxu0 0.0
    %1618 = vmatprep.subr.mxu0 0.0
    %1619 = vmatpush1.msra.mxu0 0.0
    %1620 = vmatprep.subr.mxu0 0.0
    %1621 = vmatpush1.msra.mxu0 0.0
    %1622 = vmatprep.subr.mxu0 0.0
    %1623 = vmatpush1.msra.mxu0 0.0
    %1624 = vmatprep.subr.mxu0 0.0
    %1625 = vmatpush1.msra.mxu0 0.0
    %1626 = vmatprep.subr.mxu0 0.0
    %1627 = vmatpush1.msra.mxu0 0.0
    %1628 = vmatprep.subr.mxu0 0.0
    %1629 = vmatpush1.msra.mxu0 0.0
    %1630 = vmatprep.subr.mxu0 0.0
    %1631 = vmatpush1.msra.mxu0 0.0
    %1632 = vmatprep.subr.mxu0 0.0
    %1633 = vmatpush1.msra.mxu0 0.0
    %1634 = vmatprep.subr.mxu0 0.0
    %1635 = vmatpush1.msra.mxu0 0.0
    %1636 = vmatprep.subr.mxu0 0.0
    %1637 = vmatpush1.msra.mxu0 0.0
    %1638 = vmatprep.subr.mxu0 0.0
    %1639 = vmatpush1.msra.mxu0 0.0
    %1640 = vmatprep.subr.mxu0 0.0
    %1641 = vmatpush1.msra.mxu0 0.0
    %1642 = vmatprep.subr.mxu0 0.0
    %1643 = vmatpush1.msra.mxu0 0.0
    %1644 = vmatprep.subr.mxu0 0.0
    %1645 = vmatpush1.msra.mxu0 0.0
    %1646 = vmatprep.subr.mxu0 0.0
    %1647 = vmatpush1.msra.mxu0 0.0
    %1648 = vmatprep.subr.mxu0 0.0
    %1649 = vmatpush1.msra.mxu0 0.0
    %1650 = vmatprep.subr.mxu0 0.0
    %1651 = vmatpush1.msra.mxu0 0.0
    %1652 = vmatprep.subr.mxu0 0.0
    %1653 = vmatpush1.msra.mxu0 0.0
    %1654 = vmatprep.subr.mxu0 0.0
    %1655 = vmatpush1.msra.mxu0 0.0
    %1656 = vmatprep.subr.mxu0 0.0
    %1657 = vmatpush1.msra.mxu0 0.0
    %1658 = vmatprep.subr.mxu0 0.0
    %1659 = vmatpush1.msra.mxu0 0.0
    %1660 = vmatprep.subr.mxu0 0.0
    %1661 = vmatpush1.msra.mxu0 0.0
    %1662 = vmatprep.subr.mxu0 0.0
    %1663 = vmatpush1.msra.mxu0 0.0
    %1664 = vmatprep.subr.mxu0 0.0
    %1665 = vmatpush1.msra.mxu0 0.0
    %1666 = vmatprep.subr.mxu0 0.0
    %1667 = vmatpush1.msra.mxu0 0.0
    %1668 = vmatprep.subr.mxu0 0.0
    %1669 = vmatpush1.msra.mxu0 0.0
    %1670 = vmatprep.mubr.f32.mxu0 0.0
    %1671 = vmatmul.mubr.f32.gmra.mrb[0].mxu0 %v1604
    %v1672 = vpop.f32.mrb[0].mxu0
    %v1673 = vadd.f32 0.0, %v1672
    %v1674 = vpop.f32.mrb[0].mxu0
    %1675 = vdwg.mxu0
    %v1677 = vrot.slane %v1673, 6
    %v1679 = vadd.f32 %v1074, %v1677
    %v1680 = vxor.u32 %v1679, 2147483648
    %v1681 = vmul.f32 %v1680, 1.442695
    %v1682 = vpow.pop %v1681
    %v1683 = vadd.f32 %v1682, 1.0
    %v1684 = vrcp.pop %v1683
    %v1685 = vmul.f32 1.0, %v1684
    %v1686 = vmul.f32 %v1685, 2.0
    %v1687 = vsub.f32 %v1686, 1.0
    %v1689 = vrot.slane %v1594, 6
    %v1691 = vmul.f32 %v1685, %v1689
    %1693 = vrot.lane.b32.xlu0 %v1687, 64
    %v1694 = vpop.permute.xlu0 %1693
    %v1696 = vmul.f32 %v1685, %v1694
    %1698 = vrot.lane.b32.xlu0 %v1696, 32
    %v1699 = vpop.permute.xlu0 %1698
    %v1701 = vadd.f32 %v1691, %v1699
    %v1702 = vtanh.pop %v1701
    %1704 = vrot.lane.b32.xlu0 %v1702, 64
    %v1705 = vpop.permute.xlu0 %1704
    %v1707 = vmul.f32 %v1685, %v1705
    %v1709 = vrot.slane %v1707, 2
    %1710 = vrot.lane.b32.xlu0 %v1709, 32
    %v1711 = vpop.permute.xlu0 %1710
    %v1712 = vsel %vm119, %v1711, 0
    %1714 = vmatprep.subr.mxu0 0.0
    %1715 = vmatpush1.msra.mxu0 %v983
    %1716 = vmatprep.subr.mxu0 0.0
    %1717 = vmatpush1.msra.mxu0 %v984
    %1718 = vmatprep.subr.mxu0 0.0
    %1719 = vmatpush1.msra.mxu0 %v985
    %1720 = vmatprep.subr.mxu0 0.0
    %1721 = vmatpush1.msra.mxu0 %v986
    %1722 = vmatprep.subr.mxu0 0.0
    %1723 = vmatpush1.msra.mxu0 0.0
    %1724 = vmatprep.subr.mxu0 0.0
    %1725 = vmatpush1.msra.mxu0 0.0
    %1726 = vmatprep.subr.mxu0 0.0
    %1727 = vmatpush1.msra.mxu0 0.0
    %1728 = vmatprep.subr.mxu0 0.0
    %1729 = vmatpush1.msra.mxu0 0.0
    %1730 = vmatprep.subr.mxu0 0.0
    %1731 = vmatpush1.msra.mxu0 0.0
    %1732 = vmatprep.subr.mxu0 0.0
    %1733 = vmatpush1.msra.mxu0 0.0
    %1734 = vmatprep.subr.mxu0 0.0
    %1735 = vmatpush1.msra.mxu0 0.0
    %1736 = vmatprep.subr.mxu0 0.0
    %1737 = vmatpush1.msra.mxu0 0.0
    %1738 = vmatprep.subr.mxu0 0.0
    %1739 = vmatpush1.msra.mxu0 0.0
    %1740 = vmatprep.subr.mxu0 0.0
    %1741 = vmatpush1.msra.mxu0 0.0
    %1742 = vmatprep.subr.mxu0 0.0
    %1743 = vmatpush1.msra.mxu0 0.0
    %1744 = vmatprep.subr.mxu0 0.0
    %1745 = vmatpush1.msra.mxu0 0.0
    %1746 = vmatprep.subr.mxu0 0.0
    %1747 = vmatpush1.msra.mxu0 0.0
    %1748 = vmatprep.subr.mxu0 0.0
    %1749 = vmatpush1.msra.mxu0 0.0
    %1750 = vmatprep.subr.mxu0 0.0
    %1751 = vmatpush1.msra.mxu0 0.0
    %1752 = vmatprep.subr.mxu0 0.0
    %1753 = vmatpush1.msra.mxu0 0.0
    %1754 = vmatprep.subr.mxu0 0.0
    %1755 = vmatpush1.msra.mxu0 0.0
    %1756 = vmatprep.subr.mxu0 0.0
    %1757 = vmatpush1.msra.mxu0 0.0
    %1758 = vmatprep.subr.mxu0 0.0
    %1759 = vmatpush1.msra.mxu0 0.0
    %1760 = vmatprep.subr.mxu0 0.0
    %1761 = vmatpush1.msra.mxu0 0.0
    %1762 = vmatprep.subr.mxu0 0.0
    %1763 = vmatpush1.msra.mxu0 0.0
    %1764 = vmatprep.subr.mxu0 0.0
    %1765 = vmatpush1.msra.mxu0 0.0
    %1766 = vmatprep.subr.mxu0 0.0
    %1767 = vmatpush1.msra.mxu0 0.0
    %1768 = vmatprep.subr.mxu0 0.0
    %1769 = vmatpush1.msra.mxu0 0.0
    %1770 = vmatprep.subr.mxu0 0.0
    %1771 = vmatpush1.msra.mxu0 0.0
    %1772 = vmatprep.subr.mxu0 0.0
    %1773 = vmatpush1.msra.mxu0 0.0
    %1774 = vmatprep.subr.mxu0 0.0
    %1775 = vmatpush1.msra.mxu0 0.0
    %1776 = vmatprep.subr.mxu0 0.0
    %1777 = vmatpush1.msra.mxu0 0.0
    %1778 = vmatprep.mubr.f32.mxu0 0.0
    %1779 = vmatmul.mubr.f32.gmra.mrb[0].mxu0 %v1712
    %v1780 = vpop.f32.mrb[0].mxu0
    %v1781 = vadd.f32 0.0, %v1780
    %v1782 = vpop.f32.mrb[0].mxu0
    %1783 = vdwg.mxu0
    %v1785 = vrot.slane %v1781, 4
    %v1787 = vadd.f32 %v1074, %v1785
    %v1788 = vxor.u32 %v1787, 2147483648
    %v1789 = vmul.f32 %v1788, 1.442695
    %v1790 = vpow.pop %v1789
    %v1791 = vadd.f32 %v1790, 1.0
    %v1792 = vrcp.pop %v1791
    %v1793 = vmul.f32 1.0, %v1792
    %v1794 = vmul.f32 %v1793, 2.0
    %v1795 = vsub.f32 %v1794, 1.0
    %v1797 = vrot.slane %v1701, 6
    %v1799 = vmul.f32 %v1793, %v1797
    %1801 = vrot.lane.b32.xlu0 %v1795, 64
    %v1802 = vpop.permute.xlu0 %1801
    %v1804 = vmul.f32 %v1793, %v1802
    %1806 = vrot.lane.b32.xlu0 %v1804, 32
    %v1807 = vpop.permute.xlu0 %1806
    %v1809 = vadd.f32 %v1799, %v1807
    %v1810 = vtanh.pop %v1809
    %1812 = vrot.lane.b32.xlu0 %v1810, 64
    %v1813 = vpop.permute.xlu0 %1812
    %v1815 = vmul.f32 %v1793, %v1813
    %v1817 = vrot.slane %v1815, 4
    %1818 = vrot.lane.b32.xlu0 %v1817, 32
    %v1819 = vpop.permute.xlu0 %1818
    %v1820 = vsel %vm119, %v1819, 0
    %1822 = vmatprep.subr.mxu0 0.0
    %1823 = vmatpush1.msra.mxu0 %v983
    %1824 = vmatprep.subr.mxu0 0.0
    %1825 = vmatpush1.msra.mxu0 %v984
    %1826 = vmatprep.subr.mxu0 0.0
    %1827 = vmatpush1.msra.mxu0 %v985
    %1828 = vmatprep.subr.mxu0 0.0
    %1829 = vmatpush1.msra.mxu0 %v986
    %1830 = vmatprep.subr.mxu0 0.0
    %1831 = vmatpush1.msra.mxu0 0.0
    %1832 = vmatprep.subr.mxu0 0.0
    %1833 = vmatpush1.msra.mxu0 0.0
    %1834 = vmatprep.subr.mxu0 0.0
    %1835 = vmatpush1.msra.mxu0 0.0
    %1836 = vmatprep.subr.mxu0 0.0
    %1837 = vmatpush1.msra.mxu0 0.0
    %1838 = vmatprep.subr.mxu0 0.0
    %1839 = vmatpush1.msra.mxu0 0.0
    %1840 = vmatprep.subr.mxu0 0.0
    %1841 = vmatpush1.msra.mxu0 0.0
    %1842 = vmatprep.subr.mxu0 0.0
    %1843 = vmatpush1.msra.mxu0 0.0
    %1844 = vmatprep.subr.mxu0 0.0
    %1845 = vmatpush1.msra.mxu0 0.0
    %1846 = vmatprep.subr.mxu0 0.0
    %1847 = vmatpush1.msra.mxu0 0.0
    %1848 = vmatprep.subr.mxu0 0.0
    %1849 = vmatpush1.msra.mxu0 0.0
    %1850 = vmatprep.subr.mxu0 0.0
    %1851 = vmatpush1.msra.mxu0 0.0
    %1852 = vmatprep.subr.mxu0 0.0
    %1853 = vmatpush1.msra.mxu0 0.0
    %1854 = vmatprep.subr.mxu0 0.0
    %1855 = vmatpush1.msra.mxu0 0.0
    %1856 = vmatprep.subr.mxu0 0.0
    %1857 = vmatpush1.msra.mxu0 0.0
    %1858 = vmatprep.subr.mxu0 0.0
    %1859 = vmatpush1.msra.mxu0 0.0
    %1860 = vmatprep.subr.mxu0 0.0
    %1861 = vmatpush1.msra.mxu0 0.0
    %1862 = vmatprep.subr.mxu0 0.0
    %1863 = vmatpush1.msra.mxu0 0.0
    %1864 = vmatprep.subr.mxu0 0.0
    %1865 = vmatpush1.msra.mxu0 0.0
    %1866 = vmatprep.subr.mxu0 0.0
    %1867 = vmatpush1.msra.mxu0 0.0
    %1868 = vmatprep.subr.mxu0 0.0
    %1869 = vmatpush1.msra.mxu0 0.0
    %1870 = vmatprep.subr.mxu0 0.0
    %1871 = vmatpush1.msra.mxu0 0.0
    %1872 = vmatprep.subr.mxu0 0.0
    %1873 = vmatpush1.msra.mxu0 0.0
    %1874 = vmatprep.subr.mxu0 0.0
    %1875 = vmatpush1.msra.mxu0 0.0
    %1876 = vmatprep.subr.mxu0 0.0
    %1877 = vmatpush1.msra.mxu0 0.0
    %1878 = vmatprep.subr.mxu0 0.0
    %1879 = vmatpush1.msra.mxu0 0.0
    %1880 = vmatprep.subr.mxu0 0.0
    %1881 = vmatpush1.msra.mxu0 0.0
    %1882 = vmatprep.subr.mxu0 0.0
    %1883 = vmatpush1.msra.mxu0 0.0
    %1884 = vmatprep.subr.mxu0 0.0
    %1885 = vmatpush1.msra.mxu0 0.0
    %1886 = vmatprep.mubr.f32.mxu0 0.0
    %1887 = vmatmul.mubr.f32.gmra.mrb[0].mxu0 %v1820
    %v1888 = vpop.f32.mrb[0].mxu0
    %v1889 = vadd.f32 0.0, %v1888
    %v1890 = vpop.f32.mrb[0].mxu0
    %1891 = vdwg.mxu0
    %v1893 = vrot.slane %v1889, 2
    %v1895 = vadd.f32 %v1074, %v1893
    %v1896 = vxor.u32 %v1895, 2147483648
    %v1897 = vmul.f32 %v1896, 1.442695
    %v1898 = vpow.pop %v1897
    %v1899 = vadd.f32 %v1898, 1.0
    %v1900 = vrcp.pop %v1899
    %v1901 = vmul.f32 1.0, %v1900
    %v1902 = vmul.f32 %v1901, 2.0
    %v1903 = vsub.f32 %v1902, 1.0
    %v1905 = vrot.slane %v1809, 6
    %v1907 = vmul.f32 %v1901, %v1905
    %1909 = vrot.lane.b32.xlu0 %v1903, 64
    %v1910 = vpop.permute.xlu0 %1909
    %v1912 = vmul.f32 %v1901, %v1910
    %1914 = vrot.lane.b32.xlu0 %v1912, 32
    %v1915 = vpop.permute.xlu0 %1914
    %v1917 = vadd.f32 %v1907, %v1915
    %v1918 = vtanh.pop %v1917
    %1920 = vrot.lane.b32.xlu0 %v1918, 64
    %v1921 = vpop.permute.xlu0 %1920
    %v1923 = vmul.f32 %v1901, %v1921
    %v1924 = vld [vmem:[#allocation2 + $0x78] sm:$0x1]
    %v1925 = vld [vmem:[#allocation2 + $0x79] sm:$0x1]
    %v1926 = vlaneseq
    %v1927 = vshrl.u32 %v1926, 7
    %v1928 = vsub.s32 0, %v1927
    %v1929 = vrot.slane %v1924, %v1928
    %1931 = vrot.lane.b32.xlu0 %v1929, 96
    %v1932 = vpop.permute.xlu0 %1931
    %v1934 = vmul.f32 %v1923, %v1932
    %1936 = vrot.lane.b32.xlu0 %v1934, 32
    %v1937 = vpop.permute.xlu0 %1936
    %vm1939 = vcmask 261126
    %v1940 = vsel %vm1939, %v1937, 0.0
    %1941 = vadd.xlane.f32.xlu0 %v1940
    %v1942 = vpop.xlane.xlu0 %1941
    %v1943 = vlaneseq
    %v1944 = vshrl.u32 %v1943, 7
    %v1945 = vsub.s32 0, %v1944
    %v1946 = vrot.slane %v1925, %v1945
    %v1947 = vadd.f32 %v1942, %v1946
    %vm1948 = vcmask 7174
    %1949 = vst.msk [vmem:[%s2 - $0x6] sm:$0xc0] %vm1948, %v1947
    // Predicated region
    $region14: #{stock_price_regressor_forward.1} parent=1 // pred_check
      _
    $region15: #{stock_price_regressor_forward.1} parent=1 // pred_check_branch
      %1951 = sbr.rel (0) target = $region17
    $region16: #{stock_price_regressor_forward.1} parent=1 // pred_region
      _
    $region17: #{stock_price_regressor_forward.1} parent=1 // pred_fallthru
      _
    // Predicated region
    $region18: #{stock_price_regressor_forward.1} parent=1 // pred_check
      _
    $region19: #{stock_price_regressor_forward.1} parent=1 // pred_check_branch
      %1953 = sbr.rel (0) target = $region21
    $region20: #{stock_price_regressor_forward.1} parent=1 // pred_region
      _
    $region21: #{stock_price_regressor_forward.1} parent=1 // pred_fallthru
      _
    %1954 = vsyncpa [#allocation3], 1

</llo_original>
